<compile_context>
chip_gen: v7x
topology: tpu7x:2x2x1
jax: 0.10.0
libtpu: 0.0.40
codegen_flags: <defaults>
</compile_context>

<pallas_src>
import functools

import jax
import jax.numpy as jnp
from jax import lax
from jax.experimental import pallas as pl
from jax.experimental.pallas import tpu as pltpu


def _prelu(v, alpha):
    return jnp.where(v >= 0, v, alpha * v)


def hspa_kernel(res_scale, n_bisect, cdt,
                x_ref, e2t_ref, av_ref, w1_ref, b1_ref, a1_ref, out_ref):
    # x_ref:   (1, tq, C)  f32   query tile (also the residual source)
    # e2t_ref: (1, Cr, HW) cdt   keys, pre-transposed (no per-tile XLU transpose)
    # av_ref:  (1, HW, C)  cdt   assembly features
    x_t = x_ref[0]                                                    # (tq, C) f32
    a1 = a1_ref[0]

    # ---- query projection (conv_match1 + PReLU), bf16 operands / f32 accum ----
    e1 = _prelu(jnp.dot(x_t.astype(cdt), w1_ref[...],
                        preferred_element_type=jnp.float32) + b1_ref[...], a1)

    # ---- non-local similarity score: (tq, HW), canonical MXU matmul ----
    score = jnp.dot(e1.astype(cdt), e2t_ref[0],
                    preferred_element_type=jnp.float32)

    # ---- sparsemax along the last dim (== SoftThresholdingOperation) ----
    # Linear in HW: bisection on tau (mass(tau)=sum(max(s-tau,0)) is monotone in
    # tau), then exact tau recovery from the recovered support set -> identical
    # result to the torch sort/topk formulation, all in f32.
    # TODO(synk): torch's topk(k=128)-with-refinement fast path has no Mosaic
    # sort/topk equivalent; this exact threshold search yields the same output.
    s = score - jnp.max(score, axis=-1, keepdims=True)                # row max = 0
    rows = s.shape[0]
    lo = jnp.full((rows, 1), -1.0, jnp.float32)                       # mass(lo) >= 1
    hi = jnp.zeros((rows, 1), jnp.float32)                            # mass(hi) == 0

    def bisect_body(_, carry):
        lo_c, hi_c = carry
        mid = 0.5 * (lo_c + hi_c)
        mass = jnp.sum(jnp.maximum(s - mid, 0.0), axis=-1, keepdims=True)
        ge = mass >= 1.0
        return jnp.where(ge, mid, lo_c), jnp.where(ge, hi_c, mid)

    # No unroll: the body already streams the whole (tq, HW) f32 slab.
    lo, hi = lax.fori_loop(0, n_bisect, bisect_body, (lo, hi))
    tau_b = 0.5 * (lo + hi)

    # Fused recovery: one streaming pass for the support statistics, then a
    # single pass emitting p already in the MXU compute dtype.
    supp = s > tau_b
    supp_size = jnp.sum(jnp.where(supp, 1.0, 0.0), axis=-1, keepdims=True)
    supp_sum = jnp.sum(jnp.where(supp, s, 0.0), axis=-1, keepdims=True)
    tau = (supp_sum - 1.0) / supp_size      # exact division (approx EUP would perturb tau)
    p = jnp.maximum(s - tau, 0.0).astype(cdt)                         # (tq, HW)

    # ---- aggregation + residual (residual add in f32 -> exact) ----
    y = jnp.dot(p, av_ref[0], preferred_element_type=jnp.float32)     # (tq, C)
    if res_scale == 1.0:                      # static python branch (compile-time)
        out = y + x_t
    else:
        out = res_scale * y + x_t
    out_ref[0] = out.astype(out_ref.dtype)


def hspa_pallas(x_nchw, params, *, res_scale=1.0, tq=128,
                compute_dtype=jnp.bfloat16, n_bisect=22):
    N, C, H, W = x_nchw.shape
    HW = H * W
    w1, b1, w2, b2, wa, ba, alphas = params
    Cr = w1.shape[1]
    tq = min(tq, HW)
    # TODO(synk): pad/mask path for H*W not divisible by the query tile.
    assert HW % tq == 0 and tq % 8 == 0

    cdt = jnp.dtype(compute_dtype)
    isz = cdt.itemsize

    # NHWC, spatial collapsed; f32 master copy feeds the exact residual add.
    x = jnp.transpose(x_nchw, (0, 2, 3, 1)).reshape(N, HW, C).astype(jnp.float32)
    xc = x.astype(cdt)

    w1c = w1.astype(cdt)
    b1f = b1.astype(jnp.float32)
    a1 = alphas[0:1].astype(jnp.float32)          # only PReLU-1 is needed in-kernel

    # conv_match2 / conv_assembly projections hoisted out of the q loop (plain
    # XLA, trivially small vs the HW^2 score/sparsemax work) so the Pallas grid
    # is fully parallel and carries no per-batch scratch.  Same precision policy
    # as the in-kernel path: bf16 operands, f32 accumulation, f32 PReLU.
    a2 = alphas[1].astype(jnp.float32)
    aa = alphas[2].astype(jnp.float32)
    e2 = _prelu(jnp.einsum('nqc,cr->nqr', xc, w2.astype(cdt),
                           preferred_element_type=jnp.float32)
                + b2.astype(jnp.float32), a2)
    av = _prelu(jnp.einsum('nqc,cr->nqr', xc, wa.astype(cdt),
                           preferred_element_type=jnp.float32)
                + ba.astype(jnp.float32), aa)
    e2t = jnp.transpose(e2.astype(cdt), (0, 2, 1))        # (N, Cr, HW)  keys^T
    avc = av.astype(cdt)                                   # (N, HW, C)

    # VMEM budget: double-buffered blocks + score/bisection temporaries + margin.
    resident = (2 * tq * C * 4            # x tiles
                + 2 * tq * C * 4          # out tiles
                + 2 * Cr * HW * isz       # e2^T per-batch block
                + 2 * HW * C * isz        # av   per-batch block
                + 2 * (C * Cr * isz + Cr * 4)
                + 4 * tq * HW * 4)        # s + bisection temporaries + p
    vmem_limit = int(min(64 << 20, max(32 << 20, resident + (8 << 20))))

    cost = pl.CostEstimate(
        flops=int(N * (2 * HW * C * Cr + 2 * HW * HW * (Cr + C))),
        transcendentals=0,
        bytes_accessed=int(N * (HW * C * 4            # x in
                                + Cr * HW * isz       # e2^T in
                                + HW * C * isz        # av in
                                + HW * C * 4)))       # out

    kernel = functools.partial(hspa_kernel, float(res_scale), int(n_bisect), cdt)

    out = pl.pallas_call(
        kernel,
        out_shape=jax.ShapeDtypeStruct((N, HW, C), jnp.float32),
        grid_spec=pltpu.PrefetchScalarGridSpec(
            num_scalar_prefetch=0,
            grid=(N, HW // tq),
            in_specs=[
                pl.BlockSpec((1, tq, C), lambda b, q: (b, q, 0)),    # x tile (residual)
                pl.BlockSpec((1, Cr, HW), lambda b, q: (b, 0, 0)),   # keys^T (per batch)
                pl.BlockSpec((1, HW, C), lambda b, q: (b, 0, 0)),    # assembly (per batch)
                pl.BlockSpec((C, Cr), lambda b, q: (0, 0)),          # conv_match1 weight
                pl.BlockSpec((1, Cr), lambda b, q: (0, 0)),          # conv_match1 bias
                pl.BlockSpec(memory_space=pltpu.MemorySpace.SMEM),   # PReLU-1 alpha (1,)
            ],
            out_specs=pl.BlockSpec((1, tq, C), lambda b, q: (b, q, 0)),
        ),
        compiler_params=pltpu.CompilerParams(
            dimension_semantics=("parallel", "parallel"),
            vmem_limit_bytes=vmem_limit),
        cost_estimate=cost,
    )(x, e2t, avc, w1c, b1f, a1)

    return jnp.transpose(out.reshape(N, H, W, C), (0, 3, 1, 2))


# ----------------------- pure-JAX reference (for checking) -----------------------
def _sparsemax_ref(s):
    s = s - jnp.max(s, axis=-1, keepdims=True)
    z = -jnp.sort(-s, axis=-1)
    csum = jnp.cumsum(z, axis=-1) - 1.0
    r = jnp.arange(1, s.shape[-1] + 1, dtype=s.dtype)
    supp = r * z > csum
    k = jnp.sum(supp.astype(jnp.int32), axis=-1, keepdims=True)
    tau = jnp.take_along_axis(csum, k - 1, axis=-1) / k.astype(s.dtype)
    return jnp.maximum(s - tau, 0.0)


def hspa_ref(x_nchw, params, res_scale=1.0, compute_dtype=jnp.float32):
    # Mirrors the kernel's precision policy (MXU operands in compute_dtype,
    # f32 accumulation, f32 PReLU/sparsemax/residual).
    N, C, H, W = x_nchw.shape
    HW = H * W
    w1, b1, w2, b2, wa, ba, alphas = params
    cdt = compute_dtype
    x = jnp.transpose(x_nchw, (0, 2, 3, 1)).reshape(N, HW, C).astype(jnp.float32)
    xc = x.astype(cdt)
    prelu = lambda v, a: jnp.where(v >= 0, v, a * v)
    e1 = prelu(jnp.einsum('nqc,cr->nqr', xc, w1.astype(cdt),
                          preferred_element_type=jnp.float32) + b1, alphas[0])
    e2 = prelu(jnp.einsum('nqc,cr->nqr', xc, w2.astype(cdt),
                          preferred_element_type=jnp.float32) + b2, alphas[1])
    av = prelu(jnp.einsum('nqc,cr->nqr', xc, wa.astype(cdt),
                          preferred_element_type=jnp.float32) + ba, alphas[2])
    score = jnp.einsum('nqc,nkc->nqk', e1.astype(cdt), e2.astype(cdt),
                       preferred_element_type=jnp.float32)
    p = _sparsemax_ref(score)
    y = jnp.einsum('nqk,nkc->nqc', p.astype(cdt), av.astype(cdt),
                   preferred_element_type=jnp.float32)
    out = res_scale * y + x
    return jnp.transpose(out.reshape(N, H, W, C), (0, 3, 1, 2))


if __name__ == "__main__":
    key = jax.random.PRNGKey(0)
    # small but MXU-friendly demo shapes: channel=128, reduction=2, 16x16 image
    N, C, H, W = 2, 128, 16, 16
    reduction = 2
    Cr = C // reduction
    ks = jax.random.split(key, 8)

    x = jax.random.normal(ks[0], (N, C, H, W), jnp.float32)
    # 1x1-conv weights stored as (in_ch, out_ch) matrices; biases as (1, out_ch).
    w1 = jax.random.normal(ks[1], (C, Cr), jnp.float32) * 0.1
    b1 = jax.random.normal(ks[2], (1, Cr), jnp.float32) * 0.01
    w2 = jax.random.normal(ks[3], (C, Cr), jnp.float32) * 0.1
    b2 = jax.random.normal(ks[4], (1, Cr), jnp.float32) * 0.01
    wa = jax.random.normal(ks[5], (C, C), jnp.float32) * 0.1
    ba = jax.random.normal(ks[6], (1, C), jnp.float32) * 0.01
    alphas = jnp.array([0.25, 0.25, 0.25], jnp.float32)   # nn.PReLU() default init
    params = (w1, b1, w2, b2, wa, ba, alphas)

    cdt = jnp.bfloat16
    out = hspa_pallas(x, params, res_scale=1.0, tq=128, compute_dtype=cdt)
    out = jax.block_until_ready(out)

    ref = hspa_ref(x, params, res_scale=1.0, compute_dtype=cdt)
    assert out.shape == x.shape
    max_err = float(jnp.max(jnp.abs(out - ref)))
    assert jnp.allclose(out, ref, atol=2e-3, rtol=2e-3), max_err
    print("KERNEL_OK")
</pallas_src>

<mosaic_0001>
module attributes {stable_mosaic.version = 11 : i64} {
  func.func @hspa_kernel(%arg0: i32, %arg1: i32, %arg2: memref<1x128x128xf32, #tpu.memory_space<vmem>>, %arg3: memref<1x64x256xbf16, #tpu.memory_space<vmem>>, %arg4: memref<1x256x128xbf16, #tpu.memory_space<vmem>>, %arg5: memref<128x64xbf16, #tpu.memory_space<vmem>>, %arg6: memref<1x64xf32, #tpu.memory_space<vmem>>, %arg7: memref<1xf32, #tpu.memory_space<smem>>, %arg8: memref<1x128x128xf32, #tpu.memory_space<vmem>>) attributes {dimension_semantics = [#tpu.dimension_semantics<parallel>, #tpu.dimension_semantics<parallel>], iteration_bounds = array<i64: 2, 2>, scalar_prefetch = 0 : i64, scratch_operands = 0 : i64, tpu.core_type = #tpu.core_type<tc>, window_params = [{transform_indices = @transform_0, window_bounds = array<i64: 1, 128, 128>}, {transform_indices = @transform_1, window_bounds = array<i64: 1, 64, 256>}, {transform_indices = @transform_2, window_bounds = array<i64: 1, 256, 128>}, {pipeline_mode = #tpu.pipeline_mode<synchronous>, transform_indices = @transform_3, window_bounds = array<i64: 128, 64>}, {pipeline_mode = #tpu.pipeline_mode<synchronous>, transform_indices = @transform_4, window_bounds = array<i64: 1, 64>}, {transform_indices = @transform_5, window_bounds = array<i64: 1>}, {transform_indices = @transform_6, window_bounds = array<i64: 1, 128, 128>}]} {
    %c0 = arith.constant 0 : index
    %c0_0 = arith.constant 0 : index
    %c0_1 = arith.constant 0 : index
    %0 = vector.load %arg2[%c0, %c0_0, %c0_1] : memref<1x128x128xf32, #tpu.memory_space<vmem>>, vector<1x128x128xf32>
    %1 = vector.shape_cast %0 : vector<1x128x128xf32> to vector<128x128xf32>
    %c0_2 = arith.constant 0 : index
    %2 = memref.load %arg7[%c0_2] : memref<1xf32, #tpu.memory_space<smem>>
    %3 = arith.truncf %1 : vector<128x128xf32> to vector<128x128xbf16>
    %c0_3 = arith.constant 0 : index
    %c0_4 = arith.constant 0 : index
    %4 = vector.load %arg5[%c0_3, %c0_4] : memref<128x64xbf16, #tpu.memory_space<vmem>>, vector<128x64xbf16>
    %cst = arith.constant dense<0.000000e+00> : vector<128x64xf32>
    %5 = tpu.matmul %3, %4, %cst {dimension_numbers = #tpu.dot_dimension_numbers<[1], [0], [0], [1], [0, 0, 1, 1], [], []>} : vector<128x128xbf16>, vector<128x64xbf16>, vector<128x64xf32> -> vector<128x64xf32>
    %c0_5 = arith.constant 0 : index
    %c0_6 = arith.constant 0 : index
    %6 = vector.load %arg6[%c0_5, %c0_6] : memref<1x64xf32, #tpu.memory_space<vmem>>, vector<1x64xf32>
    %7 = vector.broadcast %6 : vector<1x64xf32> to vector<128x64xf32>
    %8 = arith.addf %5, %7 : vector<128x64xf32>
    %cst_7 = arith.constant 0.000000e+00 : f32
    %9 = vector.broadcast %cst_7 : f32 to vector<128x64xf32>
    %10 = arith.cmpf oge, %8, %9 : vector<128x64xf32>
    %11 = vector.broadcast %2 : f32 to vector<128x64xf32>
    %12 = arith.mulf %11, %8 : vector<128x64xf32>
    %13 = arith.select %10, %8, %12 : vector<128x64xi1>, vector<128x64xf32>
    %14 = arith.truncf %13 : vector<128x64xf32> to vector<128x64xbf16>
    %c0_8 = arith.constant 0 : index
    %c0_9 = arith.constant 0 : index
    %c0_10 = arith.constant 0 : index
    %15 = vector.load %arg3[%c0_8, %c0_9, %c0_10] : memref<1x64x256xbf16, #tpu.memory_space<vmem>>, vector<1x64x256xbf16>
    %16 = vector.shape_cast %15 : vector<1x64x256xbf16> to vector<64x256xbf16>
    %cst_11 = arith.constant dense<0.000000e+00> : vector<128x256xf32>
    %17 = tpu.matmul %14, %16, %cst_11 {dimension_numbers = #tpu.dot_dimension_numbers<[1], [0], [0], [1], [0, 0, 1, 1], [], []>} : vector<128x64xbf16>, vector<64x256xbf16>, vector<128x256xf32> -> vector<128x256xf32>
    %cst_12 = arith.constant dense<0xFF800000> : vector<128xf32>
    %18 = vector.multi_reduction <maximumf>, %17, %cst_12 [1] : vector<128x256xf32> to vector<128xf32>
    %19 = vector.shape_cast %18 : vector<128xf32> to vector<128x1xf32>
    %20 = vector.broadcast %19 : vector<128x1xf32> to vector<128x256xf32>
    %21 = arith.subf %17, %20 : vector<128x256xf32>
    %cst_13 = arith.constant -1.000000e+00 : f32
    %22 = vector.broadcast %cst_13 : f32 to vector<128x1xf32>
    %cst_14 = arith.constant 0.000000e+00 : f32
    %23 = vector.broadcast %cst_14 : f32 to vector<128x1xf32>
    %c0_i32 = arith.constant 0 : i32
    %c22_i32 = arith.constant 22 : i32
    %24 = arith.addi %c0_i32, %c22_i32 : i32
    %c1_i32 = arith.constant 1 : i32
    %25:2 = scf.for %arg9 = %c0_i32 to %24 step %c1_i32 iter_args(%arg10 = %22, %arg11 = %23) -> (vector<128x1xf32>, vector<128x1xf32>)  : i32 {
      %55 = arith.addf %arg10, %arg11 : vector<128x1xf32>
      %cst_30 = arith.constant 5.000000e-01 : f32
      %56 = vector.broadcast %cst_30 : f32 to vector<128x1xf32>
      %57 = arith.mulf %56, %55 : vector<128x1xf32>
      %58 = vector.broadcast %57 : vector<128x1xf32> to vector<128x256xf32>
      %59 = arith.subf %21, %58 : vector<128x256xf32>
      %cst_31 = arith.constant 0.000000e+00 : f32
      %60 = vector.broadcast %cst_31 : f32 to vector<128x256xf32>
      %61 = arith.maximumf %59, %60 : vector<128x256xf32>
      %cst_32 = arith.constant dense<0.000000e+00> : vector<128xf32>
      %62 = vector.multi_reduction <add>, %61, %cst_32 [1] : vector<128x256xf32> to vector<128xf32>
      %63 = vector.shape_cast %62 : vector<128xf32> to vector<128x1xf32>
      %cst_33 = arith.constant 1.000000e+00 : f32
      %64 = vector.broadcast %cst_33 : f32 to vector<128x1xf32>
      %65 = arith.cmpf oge, %63, %64 : vector<128x1xf32>
      %66 = arith.select %65, %57, %arg10 : vector<128x1xi1>, vector<128x1xf32>
      %67 = arith.select %65, %arg11, %57 : vector<128x1xi1>, vector<128x1xf32>
      scf.yield %66, %67 : vector<128x1xf32>, vector<128x1xf32>
    }
    %26 = arith.addf %25#0, %25#1 : vector<128x1xf32>
    %cst_15 = arith.constant 5.000000e-01 : f32
    %27 = vector.broadcast %cst_15 : f32 to vector<128x1xf32>
    %28 = arith.mulf %27, %26 : vector<128x1xf32>
    %29 = vector.broadcast %28 : vector<128x1xf32> to vector<128x256xf32>
    %30 = arith.cmpf ogt, %21, %29 : vector<128x256xf32>
    %cst_16 = arith.constant 1.000000e+00 : f32
    %cst_17 = arith.constant 0.000000e+00 : f32
    %31 = vector.broadcast %cst_16 : f32 to vector<128x256xf32>
    %32 = vector.broadcast %cst_17 : f32 to vector<128x256xf32>
    %33 = arith.select %30, %31, %32 : vector<128x256xi1>, vector<128x256xf32>
    %cst_18 = arith.constant dense<0.000000e+00> : vector<128xf32>
    %34 = vector.multi_reduction <add>, %33, %cst_18 [1] : vector<128x256xf32> to vector<128xf32>
    %35 = vector.shape_cast %34 : vector<128xf32> to vector<128x1xf32>
    %cst_19 = arith.constant 0.000000e+00 : f32
    %36 = vector.broadcast %cst_19 : f32 to vector<128x256xf32>
    %37 = arith.select %30, %21, %36 : vector<128x256xi1>, vector<128x256xf32>
    %cst_20 = arith.constant dense<0.000000e+00> : vector<128xf32>
    %38 = vector.multi_reduction <add>, %37, %cst_20 [1] : vector<128x256xf32> to vector<128xf32>
    %39 = vector.shape_cast %38 : vector<128xf32> to vector<128x1xf32>
    %cst_21 = arith.constant 1.000000e+00 : f32
    %40 = vector.broadcast %cst_21 : f32 to vector<128x1xf32>
    %41 = arith.subf %39, %40 : vector<128x1xf32>
    %42 = arith.divf %41, %35 : vector<128x1xf32>
    %43 = vector.broadcast %42 : vector<128x1xf32> to vector<128x256xf32>
    %44 = arith.subf %21, %43 : vector<128x256xf32>
    %cst_22 = arith.constant 0.000000e+00 : f32
    %45 = vector.broadcast %cst_22 : f32 to vector<128x256xf32>
    %46 = arith.maximumf %44, %45 : vector<128x256xf32>
    %47 = arith.truncf %46 : vector<128x256xf32> to vector<128x256xbf16>
    %c0_23 = arith.constant 0 : index
    %c0_24 = arith.constant 0 : index
    %c0_25 = arith.constant 0 : index
    %48 = vector.load %arg4[%c0_23, %c0_24, %c0_25] : memref<1x256x128xbf16, #tpu.memory_space<vmem>>, vector<1x256x128xbf16>
    %49 = vector.shape_cast %48 : vector<1x256x128xbf16> to vector<256x128xbf16>
    %cst_26 = arith.constant dense<0.000000e+00> : vector<128x128xf32>
    %50 = tpu.matmul %47, %49, %cst_26 {dimension_numbers = #tpu.dot_dimension_numbers<[1], [0], [0], [1], [0, 0, 1, 1], [], []>} : vector<128x256xbf16>, vector<256x128xbf16>, vector<128x128xf32> -> vector<128x128xf32>
    %51 = arith.addf %50, %1 : vector<128x128xf32>
    %c0_27 = arith.constant 0 : index
    %c0_28 = arith.constant 0 : index
    %c0_29 = arith.constant 0 : index
    %52 = vector.load %arg8[%c0_27, %c0_28, %c0_29] : memref<1x128x128xf32, #tpu.memory_space<vmem>>, vector<1x128x128xf32>
    %53 = vector.shape_cast %52 : vector<1x128x128xf32> to vector<128x128xf32>
    %54 = vector.shape_cast %51 : vector<128x128xf32> to vector<1x128x128xf32>
    tpu.vector_store %arg8[%c0_27, %c0_28, %c0_29], %54 {strides = array<i32>} : memref<1x128x128xf32, #tpu.memory_space<vmem>>, vector<1x128x128xf32>,
    return
  }
  func.func @transform_0(%arg0: i32, %arg1: i32) -> (i32, i32, i32) {
    %c0_i32 = arith.constant 0 : i32
    %c0_i32_0 = arith.constant 0 : i32
    return %arg0, %arg1, %c0_i32 : i32, i32, i32
  }
  func.func @transform_1(%arg0: i32, %arg1: i32) -> (i32, i32, i32) {
    %c0_i32 = arith.constant 0 : i32
    %c0_i32_0 = arith.constant 0 : i32
    %c0_i32_1 = arith.constant 0 : i32
    return %arg0, %c0_i32, %c0_i32_0 : i32, i32, i32
  }
  func.func @transform_2(%arg0: i32, %arg1: i32) -> (i32, i32, i32) {
    %c0_i32 = arith.constant 0 : i32
    %c0_i32_0 = arith.constant 0 : i32
    %c0_i32_1 = arith.constant 0 : i32
    return %arg0, %c0_i32, %c0_i32_0 : i32, i32, i32
  }
  func.func @transform_3(%arg0: i32, %arg1: i32) -> (i32, i32) {
    %c0_i32 = arith.constant 0 : i32
    %c0_i32_0 = arith.constant 0 : i32
    %c0_i32_1 = arith.constant 0 : i32
    return %c0_i32, %c0_i32_0 : i32, i32
  }
  func.func @transform_4(%arg0: i32, %arg1: i32) -> (i32, i32) {
    %c0_i32 = arith.constant 0 : i32
    %c0_i32_0 = arith.constant 0 : i32
    %c0_i32_1 = arith.constant 0 : i32
    return %c0_i32, %c0_i32_0 : i32, i32
  }
  func.func @transform_5(%arg0: i32, %arg1: i32) -> i32 {
    %c0_i32 = arith.constant 0 : i32
    %c0_i32_0 = arith.constant 0 : i32
    return %c0_i32 : i32
  }
  func.func @transform_6(%arg0: i32, %arg1: i32) -> (i32, i32, i32) {
    %c0_i32 = arith.constant 0 : i32
    %c0_i32_0 = arith.constant 0 : i32
    return %arg0, %arg1, %c0_i32 : i32, i32, i32
  }
}

</mosaic_0001>

<llo_original>
// kernel: tpu_custom_call.1
$region0: #{tpu_custom_call.1}
  #allocation0 [shape = 'u32[]', space=smem, size = 0x4, offset = 0x4, fixed_abs, tag = 'smem constant byte address 0x4 - core index']
  #allocation1 [shape = 'u32[144,128]{1,0:T(1,128)}', space=vmem, size = 0x12000, scoped, tag = 'internal scratch']
  #allocation2 [shape = 'f32[1]{0:T(128)S(6)}', space=smem, size = 0x200, scoped, tag = 'scoped memory for tpu_custom_call.1']
  %s0 = inlined_call_operand.hbm [shape: f32[2,256,128], index: 0, kind: input, shape index: {}]
  %s1 = inlined_call_operand.hbm [shape: bf16[2,64,256], index: 1, kind: input, shape index: {}]
  %s2 = inlined_call_operand.hbm [shape: bf16[2,256,128], index: 2, kind: input, shape index: {}]
  %s3 = inlined_call_operand.vmem [shape: bf16[128,64], index: 3, kind: input, shape index: {}]
  %s4 = inlined_call_operand.vmem [shape: f32[1,64], index: 4, kind: input, shape index: {}]
  %s5 = inlined_call_operand.<no memory space> [shape: f32[1], index: 5, kind: input, shape index: {}]
  %s6 = inlined_call_operand.hbm [shape: f32[2,256,128], index: 6, kind: output, shape index: {}]
  %s7 = sld [smem:[#allocation0]]
  $region76: #{tpu_custom_call.1} parent=0
    _
  %s9 = ssub.s32 1, %s7
  %s10 = scalar_select 0, %s9, %s7
  %11 = sst [smem:[#allocation2]] %s5
  $region1: #{tpu_custom_call.1} parent=0
    #allocation3 [shape = 'u8[131072]{0}', space=vmem, size = 0x20000, scoped, tag = 'input window, operand 0']
    #allocation4 [shape = 's32[2]{0}', space=sflag, size = 0x8, scoped, tag = 'scoped memory for tpu_custom_call.1']
    #allocation5 [shape = 's32[2]{0}', space=sflag, size = 0x8, scoped, tag = 'scoped memory for tpu_custom_call.1']
    #allocation6 [shape = 'u8[65536]{0}', space=vmem, size = 0x10000, scoped, tag = 'input window, operand 1']
    #allocation7 [shape = 's32[2]{0}', space=sflag, size = 0x8, scoped, tag = 'scoped memory for tpu_custom_call.1']
    #allocation8 [shape = 'u8[131072]{0}', space=vmem, size = 0x20000, scoped, tag = 'input window, operand 2']
    #allocation9 [shape = 'u8[131072]{0}', space=vmem, size = 0x20000, scoped, tag = 'output window, operand 0']
    %12 = vsyncpa [#allocation4], 0
    %s13 = scalar_lea.sflag [#allocation4], 1
    %14 = vsyncpa %s13, 0
    %15 = vsyncpa [#allocation7], 0
    %s16 = scalar_lea.sflag [#allocation7], 1
    %17 = vsyncpa %s16, 0
    %18 = vsyncpa [#allocation5], 0
    %s19 = scalar_lea.sflag [#allocation5], 1
    %20 = vsyncpa %s19, 0
    loop: start=0, step=1, limit=6
    $region2: #{tpu_custom_call.1} parent=1 // loop_pre_header
      _
    $region3: #{tpu_custom_call.1} parent=1 // loop_header
      %s22 = sphi 0, %s26
      %p23 = scmp.ge.s32.totalorder %s22, 6
      %s29 = sphi 0, %s41
      %s30 = sphi 0, %s37
      %s31 = sphi 0, %s29
      %s32 = sphi 0, %s30
      %s33 = sphi 0, %s31
      %s34 = sphi 0, %s32
      %s46 = sphi 0, %s48
      %s49 = sphi 0, %s46
      %s50 = sphi 0, %s49
      %s66 = sphi 0, %s50
      %s72 = sphi 0, %s74
      %s75 = sphi 0, %s72
      %s76 = sphi 0, %s75
      %s92 = sphi 0, %s76
      %s98 = sphi 0, %s100
      %s101 = sphi 0, %s98
      %s102 = sphi 0, %s101
      %s118 = sphi 0, %s102
      %s122 = sphi 0, %s122
      %s124 = sphi 0, %s122
      %s125 = sphi 0, %s124
      %s139 = sphi 0, %s125
      %s143 = sphi 0, %s143
      %s145 = sphi 0, %s143
      %s146 = sphi 0, %s145
      %s160 = sphi 0, %s146
      %s164 = sphi 0, %s164
      %s166 = sphi 0, %s164
      %s167 = sphi 0, %s166
      %s181 = sphi 0, %s167
      %s189 = sphi 0, %s191
      %s192 = sphi 0, %s189
      %s193 = sphi 0, %s192
      %s209 = sphi 0, %s193
    $region4: #{tpu_custom_call.1} parent=1 // loop_header_branch
      %25 = sbr.rel (%p23) target = $region8
    $region5: #{tpu_custom_call.1} parent=1 // loop_body
      %s27 = ssub.s32 %s22, 1
      %s28 = ssub.s32 %s22, 2
      %s35 = sadd.s32 1, %s30
      %p36 = scmp.ge.s32.totalorder %s35, 2
      %s37 = scalar_select %p36, 0, %s35
      %s38 = sadd.s32 1, %s29
      %s39 = scalar_select %p36, %s38, %s29
      %p40 = scmp.ge.s32.totalorder %s39, 2
      %s41 = scalar_select %p40, 0, %s39
      %s42 = ssub.s32 %s29, %s41
      %s43 = ssub.s32 %s30, %s37
      %s44 = sor.u32 %s42, %s43
      %p45 = scmp.eq.s32.totalorder %s44, 0
      %s47 = sadd.s32 %s46, 1
      %s48 = scalar_select %p45, %s46, %s47
      %p51 = pneg %p45
      %p52 = scmp.eq.s32.totalorder %s22, 3
      %p53 = por %p51, %p52
      %p54 = scmp.ne.s32.totalorder %s46, %s49
      %p55 = scmp.eq.s32.totalorder %s22, 0
      %p56 = por %p54, %p55
      %p57 = scmp.ne.s32.totalorder %s46, %s49
      %p58 = scmp.eq.s32.totalorder %s27, 3
      %p59 = por %p57, %p58
      %p60 = scmp.ne.s32.totalorder %s49, %s50
      %p61 = scmp.eq.s32.totalorder %s27, 0
      %p62 = por %p60, %p61
      %p63 = scmp.ne.s32.totalorder %s49, %s50
      %p64 = scmp.eq.s32.totalorder %s28, 3
      %p65 = por %p63, %p64
      %p67 = scmp.ne.s32.totalorder %s50, %s66
      %p68 = scmp.eq.s32.totalorder %s28, 0
      %p69 = por %p67, %p68
      %s70 = ssub.s32 %s29, %s41
      %p71 = scmp.eq.s32.totalorder %s70, 0
      %s73 = sadd.s32 %s72, 1
      %s74 = scalar_select %p71, %s72, %s73
      %p77 = pneg %p71
      %p78 = scmp.eq.s32.totalorder %s22, 3
      %p79 = por %p77, %p78
      %p80 = scmp.ne.s32.totalorder %s72, %s75
      %p81 = scmp.eq.s32.totalorder %s22, 0
      %p82 = por %p80, %p81
      %p83 = scmp.ne.s32.totalorder %s72, %s75
      %p84 = scmp.eq.s32.totalorder %s27, 3
      %p85 = por %p83, %p84
      %p86 = scmp.ne.s32.totalorder %s75, %s76
      %p87 = scmp.eq.s32.totalorder %s27, 0
      %p88 = por %p86, %p87
      %p89 = scmp.ne.s32.totalorder %s75, %s76
      %p90 = scmp.eq.s32.totalorder %s28, 3
      %p91 = por %p89, %p90
      %p93 = scmp.ne.s32.totalorder %s76, %s92
      %p94 = scmp.eq.s32.totalorder %s28, 0
      %p95 = por %p93, %p94
      %s96 = ssub.s32 %s29, %s41
      %p97 = scmp.eq.s32.totalorder %s96, 0
      %s99 = sadd.s32 %s98, 1
      %s100 = scalar_select %p97, %s98, %s99
      %p103 = pneg %p97
      %p104 = scmp.eq.s32.totalorder %s22, 3
      %p105 = por %p103, %p104
      %p106 = scmp.ne.s32.totalorder %s98, %s101
      %p107 = scmp.eq.s32.totalorder %s22, 0
      %p108 = por %p106, %p107
      %p109 = scmp.ne.s32.totalorder %s98, %s101
      %p110 = scmp.eq.s32.totalorder %s27, 3
      %p111 = por %p109, %p110
      %p112 = scmp.ne.s32.totalorder %s101, %s102
      %p113 = scmp.eq.s32.totalorder %s27, 0
      %p114 = por %p112, %p113
      %p115 = scmp.ne.s32.totalorder %s101, %s102
      %p116 = scmp.eq.s32.totalorder %s28, 3
      %p117 = por %p115, %p116
      %p119 = scmp.ne.s32.totalorder %s102, %s118
      %p120 = scmp.eq.s32.totalorder %s28, 0
      %p121 = por %p119, %p120
      %s123 = sadd.s32 %s122, 1
      %p126 = scmp.eq.s32.totalorder %s22, 3
      %p127 = scmp.ne.s32.totalorder %s122, %s124
      %p128 = scmp.eq.s32.totalorder %s22, 0
      %p129 = por %p127, %p128
      %p130 = scmp.ne.s32.totalorder %s122, %s124
      %p131 = scmp.eq.s32.totalorder %s27, 3
      %p132 = por %p130, %p131
      %p133 = scmp.ne.s32.totalorder %s124, %s125
      %p134 = scmp.eq.s32.totalorder %s27, 0
      %p135 = por %p133, %p134
      %p136 = scmp.ne.s32.totalorder %s124, %s125
      %p137 = scmp.eq.s32.totalorder %s28, 3
      %p138 = por %p136, %p137
      %p140 = scmp.ne.s32.totalorder %s125, %s139
      %p141 = scmp.eq.s32.totalorder %s28, 0
      %p142 = por %p140, %p141
      %s144 = sadd.s32 %s143, 1
      %p147 = scmp.eq.s32.totalorder %s22, 3
      %p148 = scmp.ne.s32.totalorder %s143, %s145
      %p149 = scmp.eq.s32.totalorder %s22, 0
      %p150 = por %p148, %p149
      %p151 = scmp.ne.s32.totalorder %s143, %s145
      %p152 = scmp.eq.s32.totalorder %s27, 3
      %p153 = por %p151, %p152
      %p154 = scmp.ne.s32.totalorder %s145, %s146
      %p155 = scmp.eq.s32.totalorder %s27, 0
      %p156 = por %p154, %p155
      %p157 = scmp.ne.s32.totalorder %s145, %s146
      %p158 = scmp.eq.s32.totalorder %s28, 3
      %p159 = por %p157, %p158
      %p161 = scmp.ne.s32.totalorder %s146, %s160
      %p162 = scmp.eq.s32.totalorder %s28, 0
      %p163 = por %p161, %p162
      %s165 = sadd.s32 %s164, 1
      %p168 = scmp.eq.s32.totalorder %s22, 3
      %p169 = scmp.ne.s32.totalorder %s164, %s166
      %p170 = scmp.eq.s32.totalorder %s22, 0
      %p171 = por %p169, %p170
      %p172 = scmp.ne.s32.totalorder %s164, %s166
      %p173 = scmp.eq.s32.totalorder %s27, 3
      %p174 = por %p172, %p173
      %p175 = scmp.ne.s32.totalorder %s166, %s167
      %p176 = scmp.eq.s32.totalorder %s27, 0
      %p177 = por %p175, %p176
      %p178 = scmp.ne.s32.totalorder %s166, %s167
      %p179 = scmp.eq.s32.totalorder %s28, 3
      %p180 = por %p178, %p179
      %p182 = scmp.ne.s32.totalorder %s167, %s181
      %p183 = scmp.eq.s32.totalorder %s28, 0
      %p184 = por %p182, %p183
      %s185 = ssub.s32 %s29, %s41
      %s186 = ssub.s32 %s30, %s37
      %s187 = sor.u32 %s185, %s186
      %p188 = scmp.eq.s32.totalorder %s187, 0
      %s190 = sadd.s32 %s189, 1
      %s191 = scalar_select %p188, %s189, %s190
      %p194 = pneg %p188
      %p195 = scmp.eq.s32.totalorder %s22, 3
      %p196 = por %p194, %p195
      %p197 = scmp.ne.s32.totalorder %s189, %s192
      %p198 = scmp.eq.s32.totalorder %s22, 0
      %p199 = por %p197, %p198
      %p200 = scmp.ne.s32.totalorder %s189, %s192
      %p201 = scmp.eq.s32.totalorder %s27, 3
      %p202 = por %p200, %p201
      %p203 = scmp.ne.s32.totalorder %s192, %s193
      %p204 = scmp.eq.s32.totalorder %s27, 0
      %p205 = por %p203, %p204
      %p206 = scmp.ne.s32.totalorder %s192, %s193
      %p207 = scmp.eq.s32.totalorder %s28, 3
      %p208 = por %p206, %p207
      %p210 = scmp.ne.s32.totalorder %s193, %s209
      %p211 = scmp.eq.s32.totalorder %s28, 0
      %p212 = por %p210, %p211
      %p213 = scmp.le.s32.totalorder 1, %s22
      %p214 = scmp.lt.s32.totalorder %s22, 5
      %p215 = pnand %p213, %p214
      %p216 = pneg %p215
      // Predicated region
      $region9: #{tpu_custom_call.1} parent=5 // pred_check
        _
      $region10: #{tpu_custom_call.1} parent=5 // pred_check_branch
        %218 = sbr.rel (%p215) target = $region12
      $region11: #{tpu_custom_call.1} parent=5 // pred_region
        %s219 = ssub.s32 %s22, 1
        // Predicated region
        $region13: #{tpu_custom_call.1} parent=11 // pred_check
          %p220 = pneg %p135
        $region14: #{tpu_custom_call.1} parent=11 // pred_check_branch
          %222 = sbr.rel (%p220) target = $region16
        $region15: #{tpu_custom_call.1} parent=11 // pred_region
          _
        $region16: #{tpu_custom_call.1} parent=11 // pred_fallthru
          _
        // Predicated region
        $region17: #{tpu_custom_call.1} parent=11 // pred_check
          %p223 = pneg %p156
        $region18: #{tpu_custom_call.1} parent=11 // pred_check_branch
          %225 = sbr.rel (%p223) target = $region20
        $region19: #{tpu_custom_call.1} parent=11 // pred_region
          _
        $region20: #{tpu_custom_call.1} parent=11 // pred_fallthru
          _
        // Predicated region
        $region21: #{tpu_custom_call.1} parent=11 // pred_check
          %p226 = pneg %p177
        $region22: #{tpu_custom_call.1} parent=11 // pred_check_branch
          %228 = sbr.rel (%p226) target = $region24
        $region23: #{tpu_custom_call.1} parent=11 // pred_region
          _
        $region24: #{tpu_custom_call.1} parent=11 // pred_fallthru
          _
      $region12: #{tpu_custom_call.1} parent=5 // pred_fallthru
        _
      %p229 = scmp.lt.s32.totalorder %s22, 4
      // Predicated region
      $region25: #{tpu_custom_call.1} parent=5 // pred_check
        %p230 = pneg %p229
      $region26: #{tpu_custom_call.1} parent=5 // pred_check_branch
        %232 = sbr.rel (%p230) target = $region28
      $region27: #{tpu_custom_call.1} parent=5 // pred_region
        // Predicated region
        $region29: #{tpu_custom_call.1} parent=27 // pred_check
          %p233 = pneg %p56
        $region30: #{tpu_custom_call.1} parent=27 // pred_check_branch
          %235 = sbr.rel (%p233) target = $region32
        $region31: #{tpu_custom_call.1} parent=27 // pred_region
          %s236 = sand.u32 %s46, 1
          %s237 = scalar_lea.sflag [#allocation4], %s236
          %s238 = sand.u32 %s46, 1
          %s239 = smul.addr %s238, 128
          %s240 = scalar_lea.vmem [#allocation3], %s239
          %s241 = smul.u32 16, %s30
          %s243 = ssub.s32 2048, 2048
          %244 = vsyncadd %s237, %s243
          %s245 = smul.addr %s29, 32
          %s246 = sadd.s32 %s241, %s245
          %s247 = smul.addr %s246, 128
          %s248 = scalar_lea.hbm %s0, %s247
          %s249 = sshll.u32 %s240, 4
          %s250 = int_to_ptr.vmem [resolvable:$true] %s249
          %255 = dma.hbm_to_vmem [thread:$0]  %s248, 2048, %s250, %s237, 128, 128, 8
        $region32: #{tpu_custom_call.1} parent=27 // pred_fallthru
          _
        // Predicated region
        $region33: #{tpu_custom_call.1} parent=27 // pred_check
          %p256 = pneg %p82
        $region34: #{tpu_custom_call.1} parent=27 // pred_check_branch
          %258 = sbr.rel (%p256) target = $region36
        $region35: #{tpu_custom_call.1} parent=27 // pred_region
          %s259 = sand.u32 %s22, 1
          %s260 = scalar_lea.sflag [#allocation7], %s259
          %s261 = sand.u32 %s72, 1
          %s262 = smul.addr %s261, 64
          %s263 = scalar_lea.vmem [#allocation6], %s262
          %s265 = ssub.s32 1024, 1024
          %266 = vsyncadd %s260, %s265
          %s267 = smul.addr %s29, 16
          %s268 = smul.addr %s267, 64
          %s269 = scalar_lea.hbm %s1, %s268
          %s270 = sshll.u32 %s263, 4
          %s271 = int_to_ptr.vmem [resolvable:$true] %s270
          %276 = dma.hbm_to_vmem [thread:$0]  %s269, 1024, %s271, %s260, 128, 128, 8
        $region36: #{tpu_custom_call.1} parent=27 // pred_fallthru
          _
        // Predicated region
        $region37: #{tpu_custom_call.1} parent=27 // pred_check
          %p277 = pneg %p108
        $region38: #{tpu_custom_call.1} parent=27 // pred_check_branch
          %279 = sbr.rel (%p277) target = $region40
        $region39: #{tpu_custom_call.1} parent=27 // pred_region
          %s280 = sand.u32 %s22, 1
          %s281 = scalar_lea.sflag [#allocation7], %s280
          %s282 = sand.u32 %s98, 1
          %s283 = smul.addr %s282, 128
          %s284 = scalar_lea.vmem [#allocation8], %s283
          %s286 = ssub.s32 2048, 2048
          %287 = vsyncadd %s281, %s286
          %s288 = smul.addr %s29, 32
          %s289 = smul.addr %s288, 64
          %s290 = scalar_lea.hbm %s2, %s289
          %s291 = sshll.u32 %s284, 4
          %s292 = int_to_ptr.vmem [resolvable:$true] %s291
          %297 = dma.hbm_to_vmem [thread:$0]  %s290, 2048, %s292, %s281, 64, 64, 4
        $region40: #{tpu_custom_call.1} parent=27 // pred_fallthru
          _
      $region28: #{tpu_custom_call.1} parent=5 // pred_fallthru
        _
      %p298 = scmp.le.s32.totalorder 1, %s22
      %p299 = scmp.lt.s32.totalorder %s22, 5
      %p300 = pnand %p298, %p299
      %p301 = pneg %p300
      // Predicated region
      $region41: #{tpu_custom_call.1} parent=5 // pred_check
        _
      $region42: #{tpu_custom_call.1} parent=5 // pred_check_branch
        %303 = sbr.rel (%p300) target = $region44
      $region43: #{tpu_custom_call.1} parent=5 // pred_region
        %s304 = ssub.s32 %s22, 1
        %s305 = sand.u32 %s49, 1
        %s306 = scalar_lea.sflag [#allocation4], %s305
        %s307 = sand.u32 %s49, 1
        %s308 = smul.addr %s307, 128
        %s309 = scalar_lea.vmem [#allocation3], %s308
        // Predicated region
        $region45: #{tpu_custom_call.1} parent=43 // pred_check
          %p310 = pneg %p62
        $region46: #{tpu_custom_call.1} parent=43 // pred_check_branch
          %312 = sbr.rel (%p310) target = $region48
        $region47: #{tpu_custom_call.1} parent=43 // pred_region
          %313 = dma.done %s306, 2048
        $region48: #{tpu_custom_call.1} parent=43 // pred_fallthru
          _
        %s314 = sand.u32 %s27, 1
        %s315 = scalar_lea.sflag [#allocation7], %s314
        %s316 = sand.u32 %s75, 1
        %s317 = smul.addr %s316, 64
        %s318 = scalar_lea.vmem [#allocation6], %s317
        // Predicated region
        $region49: #{tpu_custom_call.1} parent=43 // pred_check
          %p319 = pneg %p88
        $region50: #{tpu_custom_call.1} parent=43 // pred_check_branch
          %321 = sbr.rel (%p319) target = $region52
        $region51: #{tpu_custom_call.1} parent=43 // pred_region
          %322 = dma.done %s315, 1024
        $region52: #{tpu_custom_call.1} parent=43 // pred_fallthru
          _
        %s323 = sand.u32 %s27, 1
        %s324 = scalar_lea.sflag [#allocation7], %s323
        %s325 = sand.u32 %s101, 1
        %s326 = smul.addr %s325, 128
        %s327 = scalar_lea.vmem [#allocation8], %s326
        // Predicated region
        $region53: #{tpu_custom_call.1} parent=43 // pred_check
          %p328 = pneg %p114
        $region54: #{tpu_custom_call.1} parent=43 // pred_check_branch
          %330 = sbr.rel (%p328) target = $region56
        $region55: #{tpu_custom_call.1} parent=43 // pred_region
          %331 = dma.done %s324, 2048
        $region56: #{tpu_custom_call.1} parent=43 // pred_fallthru
          _
        %s332 = sand.u32 %s49, 1
        %s333 = scalar_lea.sflag [#allocation4], %s332
        %s334 = sand.u32 %s49, 1
        %s335 = smul.addr %s334, 128
        %s336 = scalar_lea.vmem [#allocation3], %s335
        %p337 = pneg %p62
        %p338 = pneg %p59
        %s339 = sand.u32 %s27, 1
        %s340 = scalar_lea.sflag [#allocation7], %s339
        %s341 = sand.u32 %s75, 1
        %s342 = smul.addr %s341, 64
        %s343 = scalar_lea.vmem [#allocation6], %s342
        %p344 = pneg %p88
        %p345 = pneg %p85
        %s346 = sand.u32 %s27, 1
        %s347 = scalar_lea.sflag [#allocation7], %s346
        %s348 = sand.u32 %s101, 1
        %s349 = smul.addr %s348, 128
        %s350 = scalar_lea.vmem [#allocation8], %s349
        %p351 = pneg %p114
        %p352 = pneg %p111
        %p353 = pneg %p135
        %p354 = pneg %p132
        %p355 = pneg %p156
        %p356 = pneg %p153
        %p357 = pneg %p177
        %p358 = pneg %p174
        %p359 = pneg %p205
        %p360 = pneg %p202
        %s361 = sand.u32 %s192, 1
        %s362 = scalar_lea.sflag [#allocation5], %s361
        %s363 = sand.u32 %s192, 1
        %s364 = smul.addr %s363, 128
        %s365 = scalar_lea.vmem [#allocation9], %s364
        %s366 = smul.u32 16, %s32
        %s367 = smul.u32 16, %s32
        %v369 = vld [vmem:[%s309] sm:$0xff]
        %v370 = vld [vmem:[%s309 + $0x8] sm:$0xff]
        %v371 = vld [vmem:[%s309 + $0x10] sm:$0xff]
        %v372 = vld [vmem:[%s309 + $0x18] sm:$0xff]
        %v373 = vld [vmem:[%s309 + $0x20] sm:$0xff]
        %v374 = vld [vmem:[%s309 + $0x28] sm:$0xff]
        %v375 = vld [vmem:[%s309 + $0x30] sm:$0xff]
        %v376 = vld [vmem:[%s309 + $0x38] sm:$0xff]
        %v377 = vld [vmem:[%s309 + $0x40] sm:$0xff]
        %v378 = vld [vmem:[%s309 + $0x48] sm:$0xff]
        %v379 = vld [vmem:[%s309 + $0x50] sm:$0xff]
        %v380 = vld [vmem:[%s309 + $0x58] sm:$0xff]
        %v381 = vld [vmem:[%s309 + $0x60] sm:$0xff]
        %v382 = vld [vmem:[%s309 + $0x68] sm:$0xff]
        %v383 = vld [vmem:[%s309 + $0x70] sm:$0xff]
        %v384 = vld [vmem:[%s309 + $0x78] sm:$0xff]
        %s385 = sld [smem:[#allocation2]]
        %v386 = vpack.c.bf16 %v370, %v369
        %v387 = vpack.c.bf16 %v372, %v371
        %v388 = vpack.c.bf16 %v374, %v373
        %v389 = vpack.c.bf16 %v376, %v375
        %v390 = vpack.c.bf16 %v378, %v377
        %v391 = vpack.c.bf16 %v380, %v379
        %v392 = vpack.c.bf16 %v382, %v381
        %v393 = vpack.c.bf16 %v384, %v383
        %v394 = vld [vmem:[%s3] sm:$0xf]
        %v395 = vld [vmem:[%s3 + $0x4] sm:$0xf]
        %v396 = vld [vmem:[%s3 + $0x8] sm:$0xf]
        %v397 = vld [vmem:[%s3 + $0xc] sm:$0xf]
        %v398 = vld [vmem:[%s3 + $0x10] sm:$0xf]
        %v399 = vld [vmem:[%s3 + $0x14] sm:$0xf]
        %v400 = vld [vmem:[%s3 + $0x18] sm:$0xf]
        %v401 = vld [vmem:[%s3 + $0x1c] sm:$0xf]
        %v402 = vld [vmem:[%s3 + $0x20] sm:$0xf]
        %v403 = vld [vmem:[%s3 + $0x24] sm:$0xf]
        %v404 = vld [vmem:[%s3 + $0x28] sm:$0xf]
        %v405 = vld [vmem:[%s3 + $0x2c] sm:$0xf]
        %v406 = vld [vmem:[%s3 + $0x30] sm:$0xf]
        %v407 = vld [vmem:[%s3 + $0x34] sm:$0xf]
        %v408 = vld [vmem:[%s3 + $0x38] sm:$0xf]
        %v409 = vld [vmem:[%s3 + $0x3c] sm:$0xf]
        %v410 = vld [vmem:[%s4] sm:$0x1]
        %v412 = vlaneseq
        %v413 = vshrl.u32 %v412, 7
        %v414 = vsub.s32 0, %v413
        %v415 = vrot.slane %v410, %v414
        %v433 = vunpack.c.l.b16 %v394
        %v434 = vunpack.c.l.b16 %v395
        %v435 = vunpack.c.l.b16 %v396
        %v436 = vunpack.c.l.b16 %v397
        %v437 = vunpack.c.l.b16 %v398
        %v438 = vunpack.c.l.b16 %v399
        %v439 = vunpack.c.l.b16 %v400
        %v440 = vunpack.c.l.b16 %v401
        %v441 = vunpack.c.l.b16 %v402
        %v442 = vunpack.c.l.b16 %v403
        %v443 = vunpack.c.l.b16 %v404
        %v444 = vunpack.c.l.b16 %v405
        %v445 = vunpack.c.l.b16 %v406
        %v446 = vunpack.c.l.b16 %v407
        %v447 = vunpack.c.l.b16 %v408
        %v448 = vunpack.c.l.b16 %v409
        %v449 = vpack.c.b16 %v434, %v433
        %v450 = vpack.c.b16 %v436, %v435
        %v451 = vpack.c.b16 %v438, %v437
        %v452 = vpack.c.b16 %v440, %v439
        %v453 = vpack.c.b16 %v442, %v441
        %v454 = vpack.c.b16 %v444, %v443
        %v455 = vpack.c.b16 %v446, %v445
        %v456 = vpack.c.b16 %v448, %v447
        %465 = vmatprep.subr.bf16.mxu0 0
        %466 = vmatpush1.bf16.msra.mxu0 %v449
        %467 = vmatprep.subr.bf16.mxu0 0
        %468 = vmatpush1.bf16.msra.mxu0 %v450
        %469 = vmatprep.subr.bf16.mxu0 0
        %470 = vmatpush1.bf16.msra.mxu0 %v451
        %471 = vmatprep.subr.bf16.mxu0 0
        %472 = vmatpush1.bf16.msra.mxu0 %v452
        %473 = vmatprep.subr.bf16.mxu0 0
        %474 = vmatpush1.bf16.msra.mxu0 %v453
        %475 = vmatprep.subr.bf16.mxu0 0
        %476 = vmatpush1.bf16.msra.mxu0 %v454
        %477 = vmatprep.subr.bf16.mxu0 0
        %478 = vmatpush1.bf16.msra.mxu0 %v455
        %479 = vmatprep.subr.bf16.mxu0 0
        %480 = vmatpush1.bf16.msra.mxu0 %v456
        %481 = vmatprep.subr.bf16.mxu0 0
        %482 = vmatpush1.bf16.msra.mxu0 0
        %483 = vmatprep.subr.bf16.mxu0 0
        %484 = vmatpush1.bf16.msra.mxu0 0
        %485 = vmatprep.subr.bf16.mxu0 0
        %486 = vmatpush1.bf16.msra.mxu0 0
        %487 = vmatprep.subr.bf16.mxu0 0
        %488 = vmatpush1.bf16.msra.mxu0 0
        %489 = vmatprep.subr.bf16.mxu0 0
        %490 = vmatpush1.bf16.msra.mxu0 0
        %491 = vmatprep.subr.bf16.mxu0 0
        %492 = vmatpush1.bf16.msra.mxu0 0
        %493 = vmatprep.subr.bf16.mxu0 0
        %494 = vmatpush1.bf16.msra.mxu0 0
        %495 = vmatprep.subr.bf16.mxu0 0
        %496 = vmatpush1.bf16.msra.mxu0 0
        %497 = vmatprep.mubr.bf16.mxu0 0
        %498 = vmatmul.mubr.bf16.gmra.mrb[0].mxu0 %v386
        %v499 = vpop.f32.mrb[0].mxu0
        %v500 = vadd.f32 %v415, %v499
        %v501 = vpop.f32.mrb[0].mxu0
        %v502 = vpop.f32.mrb[0].mxu0
        %v503 = vadd.f32 %v415, %v502
        %v504 = vpop.f32.mrb[0].mxu0
        %505 = vmatprep.mubr.bf16.mxu0 0
        %506 = vmatmul.mubr.bf16.gmra.mrb[0].mxu0 %v387
        %v507 = vpop.f32.mrb[0].mxu0
        %v508 = vadd.f32 %v415, %v507
        %v509 = vpop.f32.mrb[0].mxu0
        %v510 = vpop.f32.mrb[0].mxu0
        %v511 = vadd.f32 %v415, %v510
        %v512 = vpop.f32.mrb[0].mxu0
        %513 = vmatprep.mubr.bf16.mxu0 0
        %514 = vmatmul.mubr.bf16.gmra.mrb[0].mxu0 %v388
        %v515 = vpop.f32.mrb[0].mxu0
        %v516 = vadd.f32 %v415, %v515
        %v517 = vpop.f32.mrb[0].mxu0
        %v518 = vpop.f32.mrb[0].mxu0
        %v519 = vadd.f32 %v415, %v518
        %v520 = vpop.f32.mrb[0].mxu0
        %521 = vmatprep.mubr.bf16.mxu0 0
        %522 = vmatmul.mubr.bf16.gmra.mrb[0].mxu0 %v389
        %v523 = vpop.f32.mrb[0].mxu0
        %v524 = vadd.f32 %v415, %v523
        %v525 = vpop.f32.mrb[0].mxu0
        %v526 = vpop.f32.mrb[0].mxu0
        %v527 = vadd.f32 %v415, %v526
        %v528 = vpop.f32.mrb[0].mxu0
        %529 = vmatprep.mubr.bf16.mxu0 0
        %530 = vmatmul.mubr.bf16.gmra.mrb[0].mxu0 %v390
        %v531 = vpop.f32.mrb[0].mxu0
        %v532 = vadd.f32 %v415, %v531
        %v533 = vpop.f32.mrb[0].mxu0
        %v534 = vpop.f32.mrb[0].mxu0
        %v535 = vadd.f32 %v415, %v534
        %v536 = vpop.f32.mrb[0].mxu0
        %537 = vmatprep.mubr.bf16.mxu0 0
        %538 = vmatmul.mubr.bf16.gmra.mrb[0].mxu0 %v391
        %v539 = vpop.f32.mrb[0].mxu0
        %v540 = vadd.f32 %v415, %v539
        %v541 = vpop.f32.mrb[0].mxu0
        %v542 = vpop.f32.mrb[0].mxu0
        %v543 = vadd.f32 %v415, %v542
        %v544 = vpop.f32.mrb[0].mxu0
        %545 = vmatprep.mubr.bf16.mxu0 0
        %546 = vmatmul.mubr.bf16.gmra.mrb[0].mxu0 %v392
        %v547 = vpop.f32.mrb[0].mxu0
        %v548 = vadd.f32 %v415, %v547
        %v549 = vpop.f32.mrb[0].mxu0
        %v550 = vpop.f32.mrb[0].mxu0
        %v551 = vadd.f32 %v415, %v550
        %v552 = vpop.f32.mrb[0].mxu0
        %553 = vmatprep.mubr.bf16.mxu0 0
        %554 = vmatmul.mubr.bf16.gmra.mrb[0].mxu0 %v393
        %v555 = vpop.f32.mrb[0].mxu0
        %v556 = vadd.f32 %v415, %v555
        %v557 = vpop.f32.mrb[0].mxu0
        %v558 = vpop.f32.mrb[0].mxu0
        %v559 = vadd.f32 %v415, %v558
        %v560 = vpop.f32.mrb[0].mxu0
        %561 = vdwg.mxu0
        %vm562 = vcmp.ge.f32.partialorder %v500, 0.0
        %vm563 = vcmp.ge.f32.partialorder %v503, 0.0
        %vm564 = vcmp.ge.f32.partialorder %v508, 0.0
        %vm565 = vcmp.ge.f32.partialorder %v511, 0.0
        %vm566 = vcmp.ge.f32.partialorder %v516, 0.0
        %vm567 = vcmp.ge.f32.partialorder %v519, 0.0
        %vm568 = vcmp.ge.f32.partialorder %v524, 0.0
        %vm569 = vcmp.ge.f32.partialorder %v527, 0.0
        %vm570 = vcmp.ge.f32.partialorder %v532, 0.0
        %vm571 = vcmp.ge.f32.partialorder %v535, 0.0
        %vm572 = vcmp.ge.f32.partialorder %v540, 0.0
        %vm573 = vcmp.ge.f32.partialorder %v543, 0.0
        %vm574 = vcmp.ge.f32.partialorder %v548, 0.0
        %vm575 = vcmp.ge.f32.partialorder %v551, 0.0
        %vm576 = vcmp.ge.f32.partialorder %v556, 0.0
        %vm577 = vcmp.ge.f32.partialorder %v559, 0.0
        %v578 = vstv %s385
        %v579 = vmul.f32 %v578, %v500
        %v580 = vmul.f32 %v578, %v503
        %v581 = vmul.f32 %v578, %v508
        %v582 = vmul.f32 %v578, %v511
        %v583 = vmul.f32 %v578, %v516
        %v584 = vmul.f32 %v578, %v519
        %v585 = vmul.f32 %v578, %v524
        %v586 = vmul.f32 %v578, %v527
        %v587 = vmul.f32 %v578, %v532
        %v588 = vmul.f32 %v578, %v535
        %v589 = vmul.f32 %v578, %v540
        %v590 = vmul.f32 %v578, %v543
        %v591 = vmul.f32 %v578, %v548
        %v592 = vmul.f32 %v578, %v551
        %v593 = vmul.f32 %v578, %v556
        %v594 = vmul.f32 %v578, %v559
        %v595 = vsel %vm562, %v500, %v579
        %v596 = vsel %vm563, %v503, %v580
        %v597 = vsel %vm564, %v508, %v581
        %v598 = vsel %vm565, %v511, %v582
        %v599 = vsel %vm566, %v516, %v583
        %v600 = vsel %vm567, %v519, %v584
        %v601 = vsel %vm568, %v524, %v585
        %v602 = vsel %vm569, %v527, %v586
        %v603 = vsel %vm570, %v532, %v587
        %v604 = vsel %vm571, %v535, %v588
        %v605 = vsel %vm572, %v540, %v589
        %v606 = vsel %vm573, %v543, %v590
        %v607 = vsel %vm574, %v548, %v591
        %v608 = vsel %vm575, %v551, %v592
        %v609 = vsel %vm576, %v556, %v593
        %v610 = vsel %vm577, %v559, %v594
        %v611 = vpack.c.bf16 %v596, %v595
        %v612 = vpack.c.bf16 %v598, %v597
        %v613 = vpack.c.bf16 %v600, %v599
        %v614 = vpack.c.bf16 %v602, %v601
        %v615 = vpack.c.bf16 %v604, %v603
        %v616 = vpack.c.bf16 %v606, %v605
        %v617 = vpack.c.bf16 %v608, %v607
        %v618 = vpack.c.bf16 %v610, %v609
        %v619 = vld [vmem:[%s318] sm:$0xff]
        %v620 = vld [vmem:[%s318 + $0x8] sm:$0xff]
        %v621 = vld [vmem:[%s318 + $0x10] sm:$0xff]
        %v622 = vld [vmem:[%s318 + $0x18] sm:$0xff]
        %v623 = vld [vmem:[%s318 + $0x20] sm:$0xff]
        %v624 = vld [vmem:[%s318 + $0x28] sm:$0xff]
        %v625 = vld [vmem:[%s318 + $0x30] sm:$0xff]
        %v626 = vld [vmem:[%s318 + $0x38] sm:$0xff]
        %v635 = vunpack.c.l.b16 %v619
        %v636 = vunpack.c.h.b16 %v619
        %v637 = vunpack.c.l.b16 %v620
        %v638 = vunpack.c.h.b16 %v620
        %v639 = vunpack.c.l.b16 %v621
        %v640 = vunpack.c.h.b16 %v621
        %v641 = vunpack.c.l.b16 %v622
        %v642 = vunpack.c.h.b16 %v622
        %v643 = vunpack.c.l.b16 %v623
        %v644 = vunpack.c.h.b16 %v623
        %v645 = vunpack.c.l.b16 %v624
        %v646 = vunpack.c.h.b16 %v624
        %v647 = vunpack.c.l.b16 %v625
        %v648 = vunpack.c.h.b16 %v625
        %v649 = vunpack.c.l.b16 %v626
        %v650 = vunpack.c.h.b16 %v626
        %v651 = vpack.c.b16 %v637, %v635
        %v652 = vpack.c.b16 %v638, %v636
        %v653 = vpack.c.b16 %v641, %v639
        %v654 = vpack.c.b16 %v642, %v640
        %v655 = vpack.c.b16 %v645, %v643
        %v656 = vpack.c.b16 %v646, %v644
        %v657 = vpack.c.b16 %v649, %v647
        %v658 = vpack.c.b16 %v650, %v648
        %vm667 = vcmask 523264
        %v669 = vsel %vm667, %v611, 0
        %v672 = vsel %vm667, %v612, 0
        %v675 = vsel %vm667, %v613, 0
        %v678 = vsel %vm667, %v614, 0
        %v681 = vsel %vm667, %v615, 0
        %v684 = vsel %vm667, %v616, 0
        %v687 = vsel %vm667, %v617, 0
        %v690 = vsel %vm667, %v618, 0
        %692 = vmatprep.subr.bf16.mxu0 %v652
        %693 = vmatpush1.bf16.msra.mxu0 %v651
        %694 = vmatprep.subr.bf16.mxu0 %v654
        %695 = vmatpush1.bf16.msra.mxu0 %v653
        %696 = vmatprep.subr.bf16.mxu0 %v656
        %697 = vmatpush1.bf16.msra.mxu0 %v655
        %698 = vmatprep.subr.bf16.mxu0 %v658
        %699 = vmatpush1.bf16.msra.mxu0 %v657
        %700 = vmatprep.subr.bf16.mxu0 0
        %701 = vmatpush1.bf16.msra.mxu0 0
        %702 = vmatprep.subr.bf16.mxu0 0
        %703 = vmatpush1.bf16.msra.mxu0 0
        %704 = vmatprep.subr.bf16.mxu0 0
        %705 = vmatpush1.bf16.msra.mxu0 0
        %706 = vmatprep.subr.bf16.mxu0 0
        %707 = vmatpush1.bf16.msra.mxu0 0
        %708 = vmatprep.subr.bf16.mxu0 0
        %709 = vmatpush1.bf16.msra.mxu0 0
        %710 = vmatprep.subr.bf16.mxu0 0
        %711 = vmatpush1.bf16.msra.mxu0 0
        %712 = vmatprep.subr.bf16.mxu0 0
        %713 = vmatpush1.bf16.msra.mxu0 0
        %714 = vmatprep.subr.bf16.mxu0 0
        %715 = vmatpush1.bf16.msra.mxu0 0
        %716 = vmatprep.subr.bf16.mxu0 0
        %717 = vmatpush1.bf16.msra.mxu0 0
        %718 = vmatprep.subr.bf16.mxu0 0
        %719 = vmatpush1.bf16.msra.mxu0 0
        %720 = vmatprep.subr.bf16.mxu0 0
        %721 = vmatpush1.bf16.msra.mxu0 0
        %722 = vmatprep.subr.bf16.mxu0 0
        %723 = vmatpush1.bf16.msra.mxu0 0
        %724 = vmatprep.mubr.bf16.mxu0 0
        %725 = vmatmul.mubr.bf16.gmra.mrb[0].mxu0 %v669
        %v726 = vpop.f32.mrb[0].mxu0
        %v727 = vadd.f32 0.0, %v726
        %v728 = vpop.f32.mrb[0].mxu0
        %v729 = vadd.f32 0.0, %v728
        %v730 = vpop.f32.mrb[0].mxu0
        %v731 = vadd.f32 0.0, %v730
        %v732 = vpop.f32.mrb[0].mxu0
        %v733 = vadd.f32 0.0, %v732
        %734 = vmatprep.mubr.bf16.mxu0 0
        %735 = vmatmul.mubr.bf16.gmra.mrb[0].mxu0 %v672
        %v736 = vpop.f32.mrb[0].mxu0
        %v737 = vadd.f32 0.0, %v736
        %v738 = vpop.f32.mrb[0].mxu0
        %v739 = vadd.f32 0.0, %v738
        %v740 = vpop.f32.mrb[0].mxu0
        %v741 = vadd.f32 0.0, %v740
        %v742 = vpop.f32.mrb[0].mxu0
        %v743 = vadd.f32 0.0, %v742
        %744 = vmatprep.mubr.bf16.mxu0 0
        %745 = vmatmul.mubr.bf16.gmra.mrb[0].mxu0 %v675
        %v746 = vpop.f32.mrb[0].mxu0
        %v747 = vadd.f32 0.0, %v746
        %v748 = vpop.f32.mrb[0].mxu0
        %v749 = vadd.f32 0.0, %v748
        %v750 = vpop.f32.mrb[0].mxu0
        %v751 = vadd.f32 0.0, %v750
        %v752 = vpop.f32.mrb[0].mxu0
        %v753 = vadd.f32 0.0, %v752
        %754 = vmatprep.mubr.bf16.mxu0 0
        %755 = vmatmul.mubr.bf16.gmra.mrb[0].mxu0 %v678
        %v756 = vpop.f32.mrb[0].mxu0
        %v757 = vadd.f32 0.0, %v756
        %v758 = vpop.f32.mrb[0].mxu0
        %v759 = vadd.f32 0.0, %v758
        %v760 = vpop.f32.mrb[0].mxu0
        %v761 = vadd.f32 0.0, %v760
        %v762 = vpop.f32.mrb[0].mxu0
        %v763 = vadd.f32 0.0, %v762
        %764 = vmatprep.mubr.bf16.mxu0 0
        %765 = vmatmul.mubr.bf16.gmra.mrb[0].mxu0 %v681
        %v766 = vpop.f32.mrb[0].mxu0
        %v767 = vadd.f32 0.0, %v766
        %v768 = vpop.f32.mrb[0].mxu0
        %v769 = vadd.f32 0.0, %v768
        %v770 = vpop.f32.mrb[0].mxu0
        %v771 = vadd.f32 0.0, %v770
        %v772 = vpop.f32.mrb[0].mxu0
        %v773 = vadd.f32 0.0, %v772
        %774 = vmatprep.mubr.bf16.mxu0 0
        %775 = vmatmul.mubr.bf16.gmra.mrb[0].mxu0 %v684
        %v776 = vpop.f32.mrb[0].mxu0
        %v777 = vadd.f32 0.0, %v776
        %v778 = vpop.f32.mrb[0].mxu0
        %v779 = vadd.f32 0.0, %v778
        %v780 = vpop.f32.mrb[0].mxu0
        %v781 = vadd.f32 0.0, %v780
        %v782 = vpop.f32.mrb[0].mxu0
        %v783 = vadd.f32 0.0, %v782
        %784 = vmatprep.mubr.bf16.mxu0 0
        %785 = vmatmul.mubr.bf16.gmra.mrb[0].mxu0 %v687
        %v786 = vpop.f32.mrb[0].mxu0
        %v787 = vadd.f32 0.0, %v786
        %v788 = vpop.f32.mrb[0].mxu0
        %v789 = vadd.f32 0.0, %v788
        %v790 = vpop.f32.mrb[0].mxu0
        %v791 = vadd.f32 0.0, %v790
        %v792 = vpop.f32.mrb[0].mxu0
        %v793 = vadd.f32 0.0, %v792
        %794 = vmatprep.mubr.bf16.mxu0 0
        %795 = vmatmul.mubr.bf16.gmra.mrb[0].mxu0 %v690
        %v796 = vpop.f32.mrb[0].mxu0
        %v797 = vadd.f32 0.0, %v796
        %v798 = vpop.f32.mrb[0].mxu0
        %v799 = vadd.f32 0.0, %v798
        %v800 = vpop.f32.mrb[0].mxu0
        %v801 = vadd.f32 0.0, %v800
        %v802 = vpop.f32.mrb[0].mxu0
        %v803 = vadd.f32 0.0, %v802
        %804 = vdwg.mxu0
        %v805 = vmax.f32 %v727, %v729
        %806 = vmax.xlane.f32.xlu0 %v805
        %v807 = vpop.xlane.xlu0 %806
        %v808 = vmax.f32 %v731, %v733
        %809 = vmax.xlane.f32.xlu0 %v808
        %v810 = vpop.xlane.xlu0 %809
        %v811 = vmax.f32 %v737, %v739
        %812 = vmax.xlane.f32.xlu0 %v811
        %v813 = vpop.xlane.xlu0 %812
        %v814 = vmax.f32 %v741, %v743
        %815 = vmax.xlane.f32.xlu0 %v814
        %v816 = vpop.xlane.xlu0 %815
        %v817 = vmax.f32 %v747, %v749
        %818 = vmax.xlane.f32.xlu0 %v817
        %v819 = vpop.xlane.xlu0 %818
        %v820 = vmax.f32 %v751, %v753
        %821 = vmax.xlane.f32.xlu0 %v820
        %v822 = vpop.xlane.xlu0 %821
        %v823 = vmax.f32 %v757, %v759
        %824 = vmax.xlane.f32.xlu0 %v823
        %v825 = vpop.xlane.xlu0 %824
        %v826 = vmax.f32 %v761, %v763
        %827 = vmax.xlane.f32.xlu0 %v826
        %v828 = vpop.xlane.xlu0 %827
        %v829 = vmax.f32 %v767, %v769
        %830 = vmax.xlane.f32.xlu0 %v829
        %v831 = vpop.xlane.xlu0 %830
        %v832 = vmax.f32 %v771, %v773
        %833 = vmax.xlane.f32.xlu0 %v832
        %v834 = vpop.xlane.xlu0 %833
        %v835 = vmax.f32 %v777, %v779
        %836 = vmax.xlane.f32.xlu0 %v835
        %v837 = vpop.xlane.xlu0 %836
        %v838 = vmax.f32 %v781, %v783
        %839 = vmax.xlane.f32.xlu0 %v838
        %v840 = vpop.xlane.xlu0 %839
        %v841 = vmax.f32 %v787, %v789
        %842 = vmax.xlane.f32.xlu0 %v841
        %v843 = vpop.xlane.xlu0 %842
        %v844 = vmax.f32 %v791, %v793
        %845 = vmax.xlane.f32.xlu0 %v844
        %v846 = vpop.xlane.xlu0 %845
        %v847 = vmax.f32 %v797, %v799
        %848 = vmax.xlane.f32.xlu0 %v847
        %v849 = vpop.xlane.xlu0 %848
        %v850 = vmax.f32 %v801, %v803
        %851 = vmax.xlane.f32.xlu0 %v850
        %v852 = vpop.xlane.xlu0 %851
        %v853 = vsub.f32 %v727, %v807
        %v854 = vsub.f32 %v729, %v807
        %v855 = vsub.f32 %v731, %v810
        %v856 = vsub.f32 %v733, %v810
        %v857 = vsub.f32 %v737, %v813
        %v858 = vsub.f32 %v739, %v813
        %v859 = vsub.f32 %v741, %v816
        %v860 = vsub.f32 %v743, %v816
        %v861 = vsub.f32 %v747, %v819
        %v862 = vsub.f32 %v749, %v819
        %v863 = vsub.f32 %v751, %v822
        %v864 = vsub.f32 %v753, %v822
        %v865 = vsub.f32 %v757, %v825
        %v866 = vsub.f32 %v759, %v825
        %v867 = vsub.f32 %v761, %v828
        %v868 = vsub.f32 %v763, %v828
        %v869 = vsub.f32 %v767, %v831
        %v870 = vsub.f32 %v769, %v831
        %v871 = vsub.f32 %v771, %v834
        %v872 = vsub.f32 %v773, %v834
        %v873 = vsub.f32 %v777, %v837
        %v874 = vsub.f32 %v779, %v837
        %v875 = vsub.f32 %v781, %v840
        %v876 = vsub.f32 %v783, %v840
        %v877 = vsub.f32 %v787, %v843
        %v878 = vsub.f32 %v789, %v843
        %v879 = vsub.f32 %v791, %v846
        %v880 = vsub.f32 %v793, %v846
        %v881 = vsub.f32 %v797, %v849
        %v882 = vsub.f32 %v799, %v849
        %v883 = vsub.f32 %v801, %v852
        %v884 = vsub.f32 %v803, %v852
        loop: start=0, step=1, limit=22
        $region57: #{tpu_custom_call.1} parent=43 // loop_pre_header
          _
        $region58: #{tpu_custom_call.1} parent=43 // loop_header
          %s886 = sphi 0, %s890
          %p887 = scmp.ge.s32.totalorder %s886, 22
          %v891 = vphi -1.0, %v1083
          %v892 = vphi -1.0, %v1084
          %v893 = vphi -1.0, %v1085
          %v894 = vphi -1.0, %v1086
          %v895 = vphi -1.0, %v1087
          %v896 = vphi -1.0, %v1088
          %v897 = vphi -1.0, %v1089
          %v898 = vphi -1.0, %v1090
          %v899 = vphi -1.0, %v1091
          %v900 = vphi -1.0, %v1092
          %v901 = vphi -1.0, %v1093
          %v902 = vphi -1.0, %v1094
          %v903 = vphi -1.0, %v1095
          %v904 = vphi -1.0, %v1096
          %v905 = vphi -1.0, %v1097
          %v906 = vphi -1.0, %v1098
          %v907 = vphi 0.0, %v1099
          %v908 = vphi 0.0, %v1100
          %v909 = vphi 0.0, %v1101
          %v910 = vphi 0.0, %v1102
          %v911 = vphi 0.0, %v1103
          %v912 = vphi 0.0, %v1104
          %v913 = vphi 0.0, %v1105
          %v914 = vphi 0.0, %v1106
          %v915 = vphi 0.0, %v1107
          %v916 = vphi 0.0, %v1108
          %v917 = vphi 0.0, %v1109
          %v918 = vphi 0.0, %v1110
          %v919 = vphi 0.0, %v1111
          %v920 = vphi 0.0, %v1112
          %v921 = vphi 0.0, %v1113
          %v922 = vphi 0.0, %v1114
        $region59: #{tpu_custom_call.1} parent=43 // loop_header_branch
          %889 = sbr.rel (%p887) target = $region63
        $region60: #{tpu_custom_call.1} parent=43 // loop_body
          %v923 = vadd.f32 %v891, %v907
          %v924 = vadd.f32 %v892, %v908
          %v925 = vadd.f32 %v893, %v909
          %v926 = vadd.f32 %v894, %v910
          %v927 = vadd.f32 %v895, %v911
          %v928 = vadd.f32 %v896, %v912
          %v929 = vadd.f32 %v897, %v913
          %v930 = vadd.f32 %v898, %v914
          %v931 = vadd.f32 %v899, %v915
          %v932 = vadd.f32 %v900, %v916
          %v933 = vadd.f32 %v901, %v917
          %v934 = vadd.f32 %v902, %v918
          %v935 = vadd.f32 %v903, %v919
          %v936 = vadd.f32 %v904, %v920
          %v937 = vadd.f32 %v905, %v921
          %v938 = vadd.f32 %v906, %v922
          %v939 = vmul.f32 %v923, 0.5
          %v940 = vmul.f32 %v924, 0.5
          %v941 = vmul.f32 %v925, 0.5
          %v942 = vmul.f32 %v926, 0.5
          %v943 = vmul.f32 %v927, 0.5
          %v944 = vmul.f32 %v928, 0.5
          %v945 = vmul.f32 %v929, 0.5
          %v946 = vmul.f32 %v930, 0.5
          %v947 = vmul.f32 %v931, 0.5
          %v948 = vmul.f32 %v932, 0.5
          %v949 = vmul.f32 %v933, 0.5
          %v950 = vmul.f32 %v934, 0.5
          %v951 = vmul.f32 %v935, 0.5
          %v952 = vmul.f32 %v936, 0.5
          %v953 = vmul.f32 %v937, 0.5
          %v954 = vmul.f32 %v938, 0.5
          %v955 = vsub.f32 %v853, %v939
          %v956 = vsub.f32 %v854, %v939
          %v957 = vsub.f32 %v855, %v940
          %v958 = vsub.f32 %v856, %v940
          %v959 = vsub.f32 %v857, %v941
          %v960 = vsub.f32 %v858, %v941
          %v961 = vsub.f32 %v859, %v942
          %v962 = vsub.f32 %v860, %v942
          %v963 = vsub.f32 %v861, %v943
          %v964 = vsub.f32 %v862, %v943
          %v965 = vsub.f32 %v863, %v944
          %v966 = vsub.f32 %v864, %v944
          %v967 = vsub.f32 %v865, %v945
          %v968 = vsub.f32 %v866, %v945
          %v969 = vsub.f32 %v867, %v946
          %v970 = vsub.f32 %v868, %v946
          %v971 = vsub.f32 %v869, %v947
          %v972 = vsub.f32 %v870, %v947
          %v973 = vsub.f32 %v871, %v948
          %v974 = vsub.f32 %v872, %v948
          %v975 = vsub.f32 %v873, %v949
          %v976 = vsub.f32 %v874, %v949
          %v977 = vsub.f32 %v875, %v950
          %v978 = vsub.f32 %v876, %v950
          %v979 = vsub.f32 %v877, %v951
          %v980 = vsub.f32 %v878, %v951
          %v981 = vsub.f32 %v879, %v952
          %v982 = vsub.f32 %v880, %v952
          %v983 = vsub.f32 %v881, %v953
          %v984 = vsub.f32 %v882, %v953
          %v985 = vsub.f32 %v883, %v954
          %v986 = vsub.f32 %v884, %v954
          %v987 = vmax.f32 %v955, 0.0
          %v988 = vmax.f32 %v956, 0.0
          %v989 = vmax.f32 %v957, 0.0
          %v990 = vmax.f32 %v958, 0.0
          %v991 = vmax.f32 %v959, 0.0
          %v992 = vmax.f32 %v960, 0.0
          %v993 = vmax.f32 %v961, 0.0
          %v994 = vmax.f32 %v962, 0.0
          %v995 = vmax.f32 %v963, 0.0
          %v996 = vmax.f32 %v964, 0.0
          %v997 = vmax.f32 %v965, 0.0
          %v998 = vmax.f32 %v966, 0.0
          %v999 = vmax.f32 %v967, 0.0
          %v1000 = vmax.f32 %v968, 0.0
          %v1001 = vmax.f32 %v969, 0.0
          %v1002 = vmax.f32 %v970, 0.0
          %v1003 = vmax.f32 %v971, 0.0
          %v1004 = vmax.f32 %v972, 0.0
          %v1005 = vmax.f32 %v973, 0.0
          %v1006 = vmax.f32 %v974, 0.0
          %v1007 = vmax.f32 %v975, 0.0
          %v1008 = vmax.f32 %v976, 0.0
          %v1009 = vmax.f32 %v977, 0.0
          %v1010 = vmax.f32 %v978, 0.0
          %v1011 = vmax.f32 %v979, 0.0
          %v1012 = vmax.f32 %v980, 0.0
          %v1013 = vmax.f32 %v981, 0.0
          %v1014 = vmax.f32 %v982, 0.0
          %v1015 = vmax.f32 %v983, 0.0
          %v1016 = vmax.f32 %v984, 0.0
          %v1017 = vmax.f32 %v985, 0.0
          %v1018 = vmax.f32 %v986, 0.0
          %v1019 = vadd.f32 %v987, %v988
          %1020 = vadd.xlane.f32.xlu0 %v1019
          %v1021 = vpop.xlane.xlu0 %1020
          %v1022 = vadd.f32 %v989, %v990
          %1023 = vadd.xlane.f32.xlu0 %v1022
          %v1024 = vpop.xlane.xlu0 %1023
          %v1025 = vadd.f32 %v991, %v992
          %1026 = vadd.xlane.f32.xlu0 %v1025
          %v1027 = vpop.xlane.xlu0 %1026
          %v1028 = vadd.f32 %v993, %v994
          %1029 = vadd.xlane.f32.xlu0 %v1028
          %v1030 = vpop.xlane.xlu0 %1029
          %v1031 = vadd.f32 %v995, %v996
          %1032 = vadd.xlane.f32.xlu0 %v1031
          %v1033 = vpop.xlane.xlu0 %1032
          %v1034 = vadd.f32 %v997, %v998
          %1035 = vadd.xlane.f32.xlu0 %v1034
          %v1036 = vpop.xlane.xlu0 %1035
          %v1037 = vadd.f32 %v999, %v1000
          %1038 = vadd.xlane.f32.xlu0 %v1037
          %v1039 = vpop.xlane.xlu0 %1038
          %v1040 = vadd.f32 %v1001, %v1002
          %1041 = vadd.xlane.f32.xlu0 %v1040
          %v1042 = vpop.xlane.xlu0 %1041
          %v1043 = vadd.f32 %v1003, %v1004
          %1044 = vadd.xlane.f32.xlu0 %v1043
          %v1045 = vpop.xlane.xlu0 %1044
          %v1046 = vadd.f32 %v1005, %v1006
          %1047 = vadd.xlane.f32.xlu0 %v1046
          %v1048 = vpop.xlane.xlu0 %1047
          %v1049 = vadd.f32 %v1007, %v1008
          %1050 = vadd.xlane.f32.xlu0 %v1049
          %v1051 = vpop.xlane.xlu0 %1050
          %v1052 = vadd.f32 %v1009, %v1010
          %1053 = vadd.xlane.f32.xlu0 %v1052
          %v1054 = vpop.xlane.xlu0 %1053
          %v1055 = vadd.f32 %v1011, %v1012
          %1056 = vadd.xlane.f32.xlu0 %v1055
          %v1057 = vpop.xlane.xlu0 %1056
          %v1058 = vadd.f32 %v1013, %v1014
          %1059 = vadd.xlane.f32.xlu0 %v1058
          %v1060 = vpop.xlane.xlu0 %1059
          %v1061 = vadd.f32 %v1015, %v1016
          %1062 = vadd.xlane.f32.xlu0 %v1061
          %v1063 = vpop.xlane.xlu0 %1062
          %v1064 = vadd.f32 %v1017, %v1018
          %1065 = vadd.xlane.f32.xlu0 %v1064
          %v1066 = vpop.xlane.xlu0 %1065
          %vm1067 = vcmp.ge.f32.partialorder %v1021, 1.0
          %vm1068 = vcmp.ge.f32.partialorder %v1024, 1.0
          %vm1069 = vcmp.ge.f32.partialorder %v1027, 1.0
          %vm1070 = vcmp.ge.f32.partialorder %v1030, 1.0
          %vm1071 = vcmp.ge.f32.partialorder %v1033, 1.0
          %vm1072 = vcmp.ge.f32.partialorder %v1036, 1.0
          %vm1073 = vcmp.ge.f32.partialorder %v1039, 1.0
          %vm1074 = vcmp.ge.f32.partialorder %v1042, 1.0
          %vm1075 = vcmp.ge.f32.partialorder %v1045, 1.0
          %vm1076 = vcmp.ge.f32.partialorder %v1048, 1.0
          %vm1077 = vcmp.ge.f32.partialorder %v1051, 1.0
          %vm1078 = vcmp.ge.f32.partialorder %v1054, 1.0
          %vm1079 = vcmp.ge.f32.partialorder %v1057, 1.0
          %vm1080 = vcmp.ge.f32.partialorder %v1060, 1.0
          %vm1081 = vcmp.ge.f32.partialorder %v1063, 1.0
          %vm1082 = vcmp.ge.f32.partialorder %v1066, 1.0
          %v1083 = vsel %vm1067, %v939, %v891
          %v1084 = vsel %vm1068, %v940, %v892
          %v1085 = vsel %vm1069, %v941, %v893
          %v1086 = vsel %vm1070, %v942, %v894
          %v1087 = vsel %vm1071, %v943, %v895
          %v1088 = vsel %vm1072, %v944, %v896
          %v1089 = vsel %vm1073, %v945, %v897
          %v1090 = vsel %vm1074, %v946, %v898
          %v1091 = vsel %vm1075, %v947, %v899
          %v1092 = vsel %vm1076, %v948, %v900
          %v1093 = vsel %vm1077, %v949, %v901
          %v1094 = vsel %vm1078, %v950, %v902
          %v1095 = vsel %vm1079, %v951, %v903
          %v1096 = vsel %vm1080, %v952, %v904
          %v1097 = vsel %vm1081, %v953, %v905
          %v1098 = vsel %vm1082, %v954, %v906
          %v1099 = vsel %vm1067, %v907, %v939
          %v1100 = vsel %vm1068, %v908, %v940
          %v1101 = vsel %vm1069, %v909, %v941
          %v1102 = vsel %vm1070, %v910, %v942
          %v1103 = vsel %vm1071, %v911, %v943
          %v1104 = vsel %vm1072, %v912, %v944
          %v1105 = vsel %vm1073, %v913, %v945
          %v1106 = vsel %vm1074, %v914, %v946
          %v1107 = vsel %vm1075, %v915, %v947
          %v1108 = vsel %vm1076, %v916, %v948
          %v1109 = vsel %vm1077, %v917, %v949
          %v1110 = vsel %vm1078, %v918, %v950
          %v1111 = vsel %vm1079, %v919, %v951
          %v1112 = vsel %vm1080, %v920, %v952
          %v1113 = vsel %vm1081, %v921, %v953
          %v1114 = vsel %vm1082, %v922, %v954
        $region61: #{tpu_custom_call.1} parent=43 // loop_footer
          %s890 = sadd.s32 1, %s886
        $region62: #{tpu_custom_call.1} parent=43 // loop_footer_branch
          %885 = sbr.rel target = $region58
        $region63: #{tpu_custom_call.1} parent=43 // loop_exit
          _
        %v1115 = vadd.f32 %v891, %v907
        %v1116 = vadd.f32 %v892, %v908
        %v1117 = vadd.f32 %v893, %v909
        %v1118 = vadd.f32 %v894, %v910
        %v1119 = vadd.f32 %v895, %v911
        %v1120 = vadd.f32 %v896, %v912
        %v1121 = vadd.f32 %v897, %v913
        %v1122 = vadd.f32 %v898, %v914
        %v1123 = vadd.f32 %v899, %v915
        %v1124 = vadd.f32 %v900, %v916
        %v1125 = vadd.f32 %v901, %v917
        %v1126 = vadd.f32 %v902, %v918
        %v1127 = vadd.f32 %v903, %v919
        %v1128 = vadd.f32 %v904, %v920
        %v1129 = vadd.f32 %v905, %v921
        %v1130 = vadd.f32 %v906, %v922
        %v1131 = vmul.f32 %v1115, 0.5
        %v1132 = vmul.f32 %v1116, 0.5
        %v1133 = vmul.f32 %v1117, 0.5
        %v1134 = vmul.f32 %v1118, 0.5
        %v1135 = vmul.f32 %v1119, 0.5
        %v1136 = vmul.f32 %v1120, 0.5
        %v1137 = vmul.f32 %v1121, 0.5
        %v1138 = vmul.f32 %v1122, 0.5
        %v1139 = vmul.f32 %v1123, 0.5
        %v1140 = vmul.f32 %v1124, 0.5
        %v1141 = vmul.f32 %v1125, 0.5
        %v1142 = vmul.f32 %v1126, 0.5
        %v1143 = vmul.f32 %v1127, 0.5
        %v1144 = vmul.f32 %v1128, 0.5
        %v1145 = vmul.f32 %v1129, 0.5
        %v1146 = vmul.f32 %v1130, 0.5
        %vm1147 = vcmp.gt.f32.partialorder %v853, %v1131
        %vm1148 = vcmp.gt.f32.partialorder %v854, %v1131
        %vm1149 = vcmp.gt.f32.partialorder %v855, %v1132
        %vm1150 = vcmp.gt.f32.partialorder %v856, %v1132
        %vm1151 = vcmp.gt.f32.partialorder %v857, %v1133
        %vm1152 = vcmp.gt.f32.partialorder %v858, %v1133
        %vm1153 = vcmp.gt.f32.partialorder %v859, %v1134
        %vm1154 = vcmp.gt.f32.partialorder %v860, %v1134
        %vm1155 = vcmp.gt.f32.partialorder %v861, %v1135
        %vm1156 = vcmp.gt.f32.partialorder %v862, %v1135
        %vm1157 = vcmp.gt.f32.partialorder %v863, %v1136
        %vm1158 = vcmp.gt.f32.partialorder %v864, %v1136
        %vm1159 = vcmp.gt.f32.partialorder %v865, %v1137
        %vm1160 = vcmp.gt.f32.partialorder %v866, %v1137
        %vm1161 = vcmp.gt.f32.partialorder %v867, %v1138
        %vm1162 = vcmp.gt.f32.partialorder %v868, %v1138
        %vm1163 = vcmp.gt.f32.partialorder %v869, %v1139
        %vm1164 = vcmp.gt.f32.partialorder %v870, %v1139
        %vm1165 = vcmp.gt.f32.partialorder %v871, %v1140
        %vm1166 = vcmp.gt.f32.partialorder %v872, %v1140
        %vm1167 = vcmp.gt.f32.partialorder %v873, %v1141
        %vm1168 = vcmp.gt.f32.partialorder %v874, %v1141
        %vm1169 = vcmp.gt.f32.partialorder %v875, %v1142
        %vm1170 = vcmp.gt.f32.partialorder %v876, %v1142
        %vm1171 = vcmp.gt.f32.partialorder %v877, %v1143
        %vm1172 = vcmp.gt.f32.partialorder %v878, %v1143
        %vm1173 = vcmp.gt.f32.partialorder %v879, %v1144
        %vm1174 = vcmp.gt.f32.partialorder %v880, %v1144
        %vm1175 = vcmp.gt.f32.partialorder %v881, %v1145
        %vm1176 = vcmp.gt.f32.partialorder %v882, %v1145
        %vm1177 = vcmp.gt.f32.partialorder %v883, %v1146
        %vm1178 = vcmp.gt.f32.partialorder %v884, %v1146
        %v1179 = vsel %vm1147, 1.0, 0.0
        %v1180 = vsel %vm1148, 1.0, 0.0
        %v1181 = vsel %vm1149, 1.0, 0.0
        %v1182 = vsel %vm1150, 1.0, 0.0
        %v1183 = vsel %vm1151, 1.0, 0.0
        %v1184 = vsel %vm1152, 1.0, 0.0
        %v1185 = vsel %vm1153, 1.0, 0.0
        %v1186 = vsel %vm1154, 1.0, 0.0
        %v1187 = vsel %vm1155, 1.0, 0.0
        %v1188 = vsel %vm1156, 1.0, 0.0
        %v1189 = vsel %vm1157, 1.0, 0.0
        %v1190 = vsel %vm1158, 1.0, 0.0
        %v1191 = vsel %vm1159, 1.0, 0.0
        %v1192 = vsel %vm1160, 1.0, 0.0
        %v1193 = vsel %vm1161, 1.0, 0.0
        %v1194 = vsel %vm1162, 1.0, 0.0
        %v1195 = vsel %vm1163, 1.0, 0.0
        %v1196 = vsel %vm1164, 1.0, 0.0
        %v1197 = vsel %vm1165, 1.0, 0.0
        %v1198 = vsel %vm1166, 1.0, 0.0
        %v1199 = vsel %vm1167, 1.0, 0.0
        %v1200 = vsel %vm1168, 1.0, 0.0
        %v1201 = vsel %vm1169, 1.0, 0.0
        %v1202 = vsel %vm1170, 1.0, 0.0
        %v1203 = vsel %vm1171, 1.0, 0.0
        %v1204 = vsel %vm1172, 1.0, 0.0
        %v1205 = vsel %vm1173, 1.0, 0.0
        %v1206 = vsel %vm1174, 1.0, 0.0
        %v1207 = vsel %vm1175, 1.0, 0.0
        %v1208 = vsel %vm1176, 1.0, 0.0
        %v1209 = vsel %vm1177, 1.0, 0.0
        %v1210 = vsel %vm1178, 1.0, 0.0
        %v1211 = vadd.f32 %v1179, %v1180
        %1212 = vadd.xlane.f32.xlu0 %v1211
        %v1213 = vpop.xlane.xlu0 %1212
        %v1214 = vadd.f32 %v1181, %v1182
        %1215 = vadd.xlane.f32.xlu0 %v1214
        %v1216 = vpop.xlane.xlu0 %1215
        %v1217 = vadd.f32 %v1183, %v1184
        %1218 = vadd.xlane.f32.xlu0 %v1217
        %v1219 = vpop.xlane.xlu0 %1218
        %v1220 = vadd.f32 %v1185, %v1186
        %1221 = vadd.xlane.f32.xlu0 %v1220
        %v1222 = vpop.xlane.xlu0 %1221
        %v1223 = vadd.f32 %v1187, %v1188
        %1224 = vadd.xlane.f32.xlu0 %v1223
        %v1225 = vpop.xlane.xlu0 %1224
        %v1226 = vadd.f32 %v1189, %v1190
        %1227 = vadd.xlane.f32.xlu0 %v1226
        %v1228 = vpop.xlane.xlu0 %1227
        %v1229 = vadd.f32 %v1191, %v1192
        %1230 = vadd.xlane.f32.xlu0 %v1229
        %v1231 = vpop.xlane.xlu0 %1230
        %v1232 = vadd.f32 %v1193, %v1194
        %1233 = vadd.xlane.f32.xlu0 %v1232
        %v1234 = vpop.xlane.xlu0 %1233
        %v1235 = vadd.f32 %v1195, %v1196
        %1236 = vadd.xlane.f32.xlu0 %v1235
        %v1237 = vpop.xlane.xlu0 %1236
        %v1238 = vadd.f32 %v1197, %v1198
        %1239 = vadd.xlane.f32.xlu0 %v1238
        %v1240 = vpop.xlane.xlu0 %1239
        %v1241 = vadd.f32 %v1199, %v1200
        %1242 = vadd.xlane.f32.xlu0 %v1241
        %v1243 = vpop.xlane.xlu0 %1242
        %v1244 = vadd.f32 %v1201, %v1202
        %1245 = vadd.xlane.f32.xlu0 %v1244
        %v1246 = vpop.xlane.xlu0 %1245
        %v1247 = vadd.f32 %v1203, %v1204
        %1248 = vadd.xlane.f32.xlu0 %v1247
        %v1249 = vpop.xlane.xlu0 %1248
        %v1250 = vadd.f32 %v1205, %v1206
        %1251 = vadd.xlane.f32.xlu0 %v1250
        %v1252 = vpop.xlane.xlu0 %1251
        %v1253 = vadd.f32 %v1207, %v1208
        %1254 = vadd.xlane.f32.xlu0 %v1253
        %v1255 = vpop.xlane.xlu0 %1254
        %v1256 = vadd.f32 %v1209, %v1210
        %1257 = vadd.xlane.f32.xlu0 %v1256
        %v1258 = vpop.xlane.xlu0 %1257
        %v1259 = vsel %vm1147, %v853, 0.0
        %v1260 = vsel %vm1148, %v854, 0.0
        %v1261 = vsel %vm1149, %v855, 0.0
        %v1262 = vsel %vm1150, %v856, 0.0
        %v1263 = vsel %vm1151, %v857, 0.0
        %v1264 = vsel %vm1152, %v858, 0.0
        %v1265 = vsel %vm1153, %v859, 0.0
        %v1266 = vsel %vm1154, %v860, 0.0
        %v1267 = vsel %vm1155, %v861, 0.0
        %v1268 = vsel %vm1156, %v862, 0.0
        %v1269 = vsel %vm1157, %v863, 0.0
        %v1270 = vsel %vm1158, %v864, 0.0
        %v1271 = vsel %vm1159, %v865, 0.0
        %v1272 = vsel %vm1160, %v866, 0.0
        %v1273 = vsel %vm1161, %v867, 0.0
        %v1274 = vsel %vm1162, %v868, 0.0
        %v1275 = vsel %vm1163, %v869, 0.0
        %v1276 = vsel %vm1164, %v870, 0.0
        %v1277 = vsel %vm1165, %v871, 0.0
        %v1278 = vsel %vm1166, %v872, 0.0
        %v1279 = vsel %vm1167, %v873, 0.0
        %v1280 = vsel %vm1168, %v874, 0.0
        %v1281 = vsel %vm1169, %v875, 0.0
        %v1282 = vsel %vm1170, %v876, 0.0
        %v1283 = vsel %vm1171, %v877, 0.0
        %v1284 = vsel %vm1172, %v878, 0.0
        %v1285 = vsel %vm1173, %v879, 0.0
        %v1286 = vsel %vm1174, %v880, 0.0
        %v1287 = vsel %vm1175, %v881, 0.0
        %v1288 = vsel %vm1176, %v882, 0.0
        %v1289 = vsel %vm1177, %v883, 0.0
        %v1290 = vsel %vm1178, %v884, 0.0
        %v1291 = vadd.f32 %v1259, %v1260
        %1292 = vadd.xlane.f32.xlu0 %v1291
        %v1293 = vpop.xlane.xlu0 %1292
        %v1294 = vadd.f32 %v1261, %v1262
        %1295 = vadd.xlane.f32.xlu0 %v1294
        %v1296 = vpop.xlane.xlu0 %1295
        %v1297 = vadd.f32 %v1263, %v1264
        %1298 = vadd.xlane.f32.xlu0 %v1297
        %v1299 = vpop.xlane.xlu0 %1298
        %v1300 = vadd.f32 %v1265, %v1266
        %1301 = vadd.xlane.f32.xlu0 %v1300
        %v1302 = vpop.xlane.xlu0 %1301
        %v1303 = vadd.f32 %v1267, %v1268
        %1304 = vadd.xlane.f32.xlu0 %v1303
        %v1305 = vpop.xlane.xlu0 %1304
        %v1306 = vadd.f32 %v1269, %v1270
        %1307 = vadd.xlane.f32.xlu0 %v1306
        %v1308 = vpop.xlane.xlu0 %1307
        %v1309 = vadd.f32 %v1271, %v1272
        %1310 = vadd.xlane.f32.xlu0 %v1309
        %v1311 = vpop.xlane.xlu0 %1310
        %v1312 = vadd.f32 %v1273, %v1274
        %1313 = vadd.xlane.f32.xlu0 %v1312
        %v1314 = vpop.xlane.xlu0 %1313
        %v1315 = vadd.f32 %v1275, %v1276
        %1316 = vadd.xlane.f32.xlu0 %v1315
        %v1317 = vpop.xlane.xlu0 %1316
        %v1318 = vadd.f32 %v1277, %v1278
        %1319 = vadd.xlane.f32.xlu0 %v1318
        %v1320 = vpop.xlane.xlu0 %1319
        %v1321 = vadd.f32 %v1279, %v1280
        %1322 = vadd.xlane.f32.xlu0 %v1321
        %v1323 = vpop.xlane.xlu0 %1322
        %v1324 = vadd.f32 %v1281, %v1282
        %1325 = vadd.xlane.f32.xlu0 %v1324
        %v1326 = vpop.xlane.xlu0 %1325
        %v1327 = vadd.f32 %v1283, %v1284
        %1328 = vadd.xlane.f32.xlu0 %v1327
        %v1329 = vpop.xlane.xlu0 %1328
        %v1330 = vadd.f32 %v1285, %v1286
        %1331 = vadd.xlane.f32.xlu0 %v1330
        %v1332 = vpop.xlane.xlu0 %1331
        %v1333 = vadd.f32 %v1287, %v1288
        %1334 = vadd.xlane.f32.xlu0 %v1333
        %v1335 = vpop.xlane.xlu0 %1334
        %v1336 = vadd.f32 %v1289, %v1290
        %1337 = vadd.xlane.f32.xlu0 %v1336
        %v1338 = vpop.xlane.xlu0 %1337
        %v1339 = vsub.f32 %v1293, 1.0
        %v1340 = vsub.f32 %v1296, 1.0
        %v1341 = vsub.f32 %v1299, 1.0
        %v1342 = vsub.f32 %v1302, 1.0
        %v1343 = vsub.f32 %v1305, 1.0
        %v1344 = vsub.f32 %v1308, 1.0
        %v1345 = vsub.f32 %v1311, 1.0
        %v1346 = vsub.f32 %v1314, 1.0
        %v1347 = vsub.f32 %v1317, 1.0
        %v1348 = vsub.f32 %v1320, 1.0
        %v1349 = vsub.f32 %v1323, 1.0
        %v1350 = vsub.f32 %v1326, 1.0
        %v1351 = vsub.f32 %v1329, 1.0
        %v1352 = vsub.f32 %v1332, 1.0
        %v1353 = vsub.f32 %v1335, 1.0
        %v1354 = vsub.f32 %v1338, 1.0
        %v1355 = vrcp.pop %v1213
        %v1356 = vmul.f32 %v1339, %v1355
        %v1357 = vrcp.pop %v1216
        %v1358 = vmul.f32 %v1340, %v1357
        %v1359 = vrcp.pop %v1219
        %v1360 = vmul.f32 %v1341, %v1359
        %v1361 = vrcp.pop %v1222
        %v1362 = vmul.f32 %v1342, %v1361
        %v1363 = vrcp.pop %v1225
        %v1364 = vmul.f32 %v1343, %v1363
        %v1365 = vrcp.pop %v1228
        %v1366 = vmul.f32 %v1344, %v1365
        %v1367 = vrcp.pop %v1231
        %v1368 = vmul.f32 %v1345, %v1367
        %v1369 = vrcp.pop %v1234
        %v1370 = vmul.f32 %v1346, %v1369
        %v1371 = vrcp.pop %v1237
        %v1372 = vmul.f32 %v1347, %v1371
        %v1373 = vrcp.pop %v1240
        %v1374 = vmul.f32 %v1348, %v1373
        %v1375 = vrcp.pop %v1243
        %v1376 = vmul.f32 %v1349, %v1375
        %v1377 = vrcp.pop %v1246
        %v1378 = vmul.f32 %v1350, %v1377
        %v1379 = vrcp.pop %v1249
        %v1380 = vmul.f32 %v1351, %v1379
        %v1381 = vrcp.pop %v1252
        %v1382 = vmul.f32 %v1352, %v1381
        %v1383 = vrcp.pop %v1255
        %v1384 = vmul.f32 %v1353, %v1383
        %v1385 = vrcp.pop %v1258
        %v1386 = vmul.f32 %v1354, %v1385
        %v1387 = vsub.f32 %v853, %v1356
        %v1388 = vsub.f32 %v854, %v1356
        %v1389 = vsub.f32 %v855, %v1358
        %v1390 = vsub.f32 %v856, %v1358
        %v1391 = vsub.f32 %v857, %v1360
        %v1392 = vsub.f32 %v858, %v1360
        %v1393 = vsub.f32 %v859, %v1362
        %v1394 = vsub.f32 %v860, %v1362
        %v1395 = vsub.f32 %v861, %v1364
        %v1396 = vsub.f32 %v862, %v1364
        %v1397 = vsub.f32 %v863, %v1366
        %v1398 = vsub.f32 %v864, %v1366
        %v1399 = vsub.f32 %v865, %v1368
        %v1400 = vsub.f32 %v866, %v1368
        %v1401 = vsub.f32 %v867, %v1370
        %v1402 = vsub.f32 %v868, %v1370
        %v1403 = vsub.f32 %v869, %v1372
        %v1404 = vsub.f32 %v870, %v1372
        %v1405 = vsub.f32 %v871, %v1374
        %v1406 = vsub.f32 %v872, %v1374
        %v1407 = vsub.f32 %v873, %v1376
        %v1408 = vsub.f32 %v874, %v1376
        %v1409 = vsub.f32 %v875, %v1378
        %v1410 = vsub.f32 %v876, %v1378
        %v1411 = vsub.f32 %v877, %v1380
        %v1412 = vsub.f32 %v878, %v1380
        %v1413 = vsub.f32 %v879, %v1382
        %v1414 = vsub.f32 %v880, %v1382
        %v1415 = vsub.f32 %v881, %v1384
        %v1416 = vsub.f32 %v882, %v1384
        %v1417 = vsub.f32 %v883, %v1386
        %v1418 = vsub.f32 %v884, %v1386
        %v1419 = vmax.f32 %v1387, 0.0
        %v1420 = vmax.f32 %v1388, 0.0
        %v1421 = vmax.f32 %v1389, 0.0
        %v1422 = vmax.f32 %v1390, 0.0
        %v1423 = vmax.f32 %v1391, 0.0
        %v1424 = vmax.f32 %v1392, 0.0
        %v1425 = vmax.f32 %v1393, 0.0
        %v1426 = vmax.f32 %v1394, 0.0
        %v1427 = vmax.f32 %v1395, 0.0
        %v1428 = vmax.f32 %v1396, 0.0
        %v1429 = vmax.f32 %v1397, 0.0
        %v1430 = vmax.f32 %v1398, 0.0
        %v1431 = vmax.f32 %v1399, 0.0
        %v1432 = vmax.f32 %v1400, 0.0
        %v1433 = vmax.f32 %v1401, 0.0
        %v1434 = vmax.f32 %v1402, 0.0
        %v1435 = vmax.f32 %v1403, 0.0
        %v1436 = vmax.f32 %v1404, 0.0
        %v1437 = vmax.f32 %v1405, 0.0
        %v1438 = vmax.f32 %v1406, 0.0
        %v1439 = vmax.f32 %v1407, 0.0
        %v1440 = vmax.f32 %v1408, 0.0
        %v1441 = vmax.f32 %v1409, 0.0
        %v1442 = vmax.f32 %v1410, 0.0
        %v1443 = vmax.f32 %v1411, 0.0
        %v1444 = vmax.f32 %v1412, 0.0
        %v1445 = vmax.f32 %v1413, 0.0
        %v1446 = vmax.f32 %v1414, 0.0
        %v1447 = vmax.f32 %v1415, 0.0
        %v1448 = vmax.f32 %v1416, 0.0
        %v1449 = vmax.f32 %v1417, 0.0
        %v1450 = vmax.f32 %v1418, 0.0
        %v1451 = vpack.c.bf16 %v1421, %v1419
        %v1452 = vpack.c.bf16 %v1422, %v1420
        %v1453 = vpack.c.bf16 %v1425, %v1423
        %v1454 = vpack.c.bf16 %v1426, %v1424
        %v1455 = vpack.c.bf16 %v1429, %v1427
        %v1456 = vpack.c.bf16 %v1430, %v1428
        %v1457 = vpack.c.bf16 %v1433, %v1431
        %v1458 = vpack.c.bf16 %v1434, %v1432
        %v1459 = vpack.c.bf16 %v1437, %v1435
        %v1460 = vpack.c.bf16 %v1438, %v1436
        %v1461 = vpack.c.bf16 %v1441, %v1439
        %v1462 = vpack.c.bf16 %v1442, %v1440
        %v1463 = vpack.c.bf16 %v1445, %v1443
        %v1464 = vpack.c.bf16 %v1446, %v1444
        %v1465 = vpack.c.bf16 %v1449, %v1447
        %v1466 = vpack.c.bf16 %v1450, %v1448
        %v1467 = vld [vmem:[%s327] sm:$0xf]
        %v1468 = vld [vmem:[%s327 + $0x4] sm:$0xf]
        %v1469 = vld [vmem:[%s327 + $0x8] sm:$0xf]
        %v1470 = vld [vmem:[%s327 + $0xc] sm:$0xf]
        %v1471 = vld [vmem:[%s327 + $0x10] sm:$0xf]
        %v1472 = vld [vmem:[%s327 + $0x14] sm:$0xf]
        %v1473 = vld [vmem:[%s327 + $0x18] sm:$0xf]
        %v1474 = vld [vmem:[%s327 + $0x1c] sm:$0xf]
        %v1475 = vld [vmem:[%s327 + $0x20] sm:$0xf]
        %v1476 = vld [vmem:[%s327 + $0x24] sm:$0xf]
        %v1477 = vld [vmem:[%s327 + $0x28] sm:$0xf]
        %v1478 = vld [vmem:[%s327 + $0x2c] sm:$0xf]
        %v1479 = vld [vmem:[%s327 + $0x30] sm:$0xf]
        %v1480 = vld [vmem:[%s327 + $0x34] sm:$0xf]
        %v1481 = vld [vmem:[%s327 + $0x38] sm:$0xf]
        %v1482 = vld [vmem:[%s327 + $0x3c] sm:$0xf]
        %v1483 = vld [vmem:[%s327 + $0x40] sm:$0xf]
        %v1484 = vld [vmem:[%s327 + $0x44] sm:$0xf]
        %v1485 = vld [vmem:[%s327 + $0x48] sm:$0xf]
        %v1486 = vld [vmem:[%s327 + $0x4c] sm:$0xf]
        %v1487 = vld [vmem:[%s327 + $0x50] sm:$0xf]
        %v1488 = vld [vmem:[%s327 + $0x54] sm:$0xf]
        %v1489 = vld [vmem:[%s327 + $0x58] sm:$0xf]
        %v1490 = vld [vmem:[%s327 + $0x5c] sm:$0xf]
        %v1491 = vld [vmem:[%s327 + $0x60] sm:$0xf]
        %v1492 = vld [vmem:[%s327 + $0x64] sm:$0xf]
        %v1493 = vld [vmem:[%s327 + $0x68] sm:$0xf]
        %v1494 = vld [vmem:[%s327 + $0x6c] sm:$0xf]
        %v1495 = vld [vmem:[%s327 + $0x70] sm:$0xf]
        %v1496 = vld [vmem:[%s327 + $0x74] sm:$0xf]
        %v1497 = vld [vmem:[%s327 + $0x78] sm:$0xf]
        %v1498 = vld [vmem:[%s327 + $0x7c] sm:$0xf]
        %v1531 = vunpack.c.l.b16 %v1467
        %v1532 = vunpack.c.l.b16 %v1468
        %v1533 = vunpack.c.l.b16 %v1469
        %v1534 = vunpack.c.l.b16 %v1470
        %v1535 = vunpack.c.l.b16 %v1471
        %v1536 = vunpack.c.l.b16 %v1472
        %v1537 = vunpack.c.l.b16 %v1473
        %v1538 = vunpack.c.l.b16 %v1474
        %v1539 = vunpack.c.l.b16 %v1475
        %v1540 = vunpack.c.l.b16 %v1476
        %v1541 = vunpack.c.l.b16 %v1477
        %v1542 = vunpack.c.l.b16 %v1478
        %v1543 = vunpack.c.l.b16 %v1479
        %v1544 = vunpack.c.l.b16 %v1480
        %v1545 = vunpack.c.l.b16 %v1481
        %v1546 = vunpack.c.l.b16 %v1482
        %v1547 = vunpack.c.l.b16 %v1483
        %v1548 = vunpack.c.l.b16 %v1484
        %v1549 = vunpack.c.l.b16 %v1485
        %v1550 = vunpack.c.l.b16 %v1486
        %v1551 = vunpack.c.l.b16 %v1487
        %v1552 = vunpack.c.l.b16 %v1488
        %v1553 = vunpack.c.l.b16 %v1489
        %v1554 = vunpack.c.l.b16 %v1490
        %v1555 = vunpack.c.l.b16 %v1491
        %v1556 = vunpack.c.l.b16 %v1492
        %v1557 = vunpack.c.l.b16 %v1493
        %v1558 = vunpack.c.l.b16 %v1494
        %v1559 = vunpack.c.l.b16 %v1495
        %v1560 = vunpack.c.l.b16 %v1496
        %v1561 = vunpack.c.l.b16 %v1497
        %v1562 = vunpack.c.l.b16 %v1498
        %v1563 = vpack.c.b16 %v1532, %v1531
        %v1564 = vpack.c.b16 %v1534, %v1533
        %v1565 = vpack.c.b16 %v1536, %v1535
        %v1566 = vpack.c.b16 %v1538, %v1537
        %v1567 = vpack.c.b16 %v1540, %v1539
        %v1568 = vpack.c.b16 %v1542, %v1541
        %v1569 = vpack.c.b16 %v1544, %v1543
        %v1570 = vpack.c.b16 %v1546, %v1545
        %v1571 = vpack.c.b16 %v1548, %v1547
        %v1572 = vpack.c.b16 %v1550, %v1549
        %v1573 = vpack.c.b16 %v1552, %v1551
        %v1574 = vpack.c.b16 %v1554, %v1553
        %v1575 = vpack.c.b16 %v1556, %v1555
        %v1576 = vpack.c.b16 %v1558, %v1557
        %v1577 = vpack.c.b16 %v1560, %v1559
        %v1578 = vpack.c.b16 %v1562, %v1561
        %1595 = vmatprep.subr.bf16.mxu0 0
        %1596 = vmatpush1.bf16.msra.mxu0 %v1563
        %1597 = vmatprep.subr.bf16.mxu0 0
        %1598 = vmatpush1.bf16.msra.mxu0 %v1564
        %1599 = vmatprep.subr.bf16.mxu0 0
        %1600 = vmatpush1.bf16.msra.mxu0 %v1565
        %1601 = vmatprep.subr.bf16.mxu0 0
        %1602 = vmatpush1.bf16.msra.mxu0 %v1566
        %1603 = vmatprep.subr.bf16.mxu0 0
        %1604 = vmatpush1.bf16.msra.mxu0 %v1567
        %1605 = vmatprep.subr.bf16.mxu0 0
        %1606 = vmatpush1.bf16.msra.mxu0 %v1568
        %1607 = vmatprep.subr.bf16.mxu0 0
        %1608 = vmatpush1.bf16.msra.mxu0 %v1569
        %1609 = vmatprep.subr.bf16.mxu0 0
        %1610 = vmatpush1.bf16.msra.mxu0 %v1570
        %1611 = vmatprep.subr.bf16.mxu0 0
        %1612 = vmatpush1.bf16.msra.mxu0 %v1571
        %1613 = vmatprep.subr.bf16.mxu0 0
        %1614 = vmatpush1.bf16.msra.mxu0 %v1572
        %1615 = vmatprep.subr.bf16.mxu0 0
        %1616 = vmatpush1.bf16.msra.mxu0 %v1573
        %1617 = vmatprep.subr.bf16.mxu0 0
        %1618 = vmatpush1.bf16.msra.mxu0 %v1574
        %1619 = vmatprep.subr.bf16.mxu0 0
        %1620 = vmatpush1.bf16.msra.mxu0 %v1575
        %1621 = vmatprep.subr.bf16.mxu0 0
        %1622 = vmatpush1.bf16.msra.mxu0 %v1576
        %1623 = vmatprep.subr.bf16.mxu0 0
        %1624 = vmatpush1.bf16.msra.mxu0 %v1577
        %1625 = vmatprep.subr.bf16.mxu0 0
        %1626 = vmatpush1.bf16.msra.mxu0 %v1578
        %1627 = vmatprep.mubr.bf16.mxu0 %v1452
        %1628 = vmatmul.mubr.bf16.gmra.mrb[0].mxu0 %v1451
        %v1629 = vpop.f32.mrb[0].mxu0
        %v1630 = vadd.f32 %v369, %v1629
        %v1631 = vpop.f32.mrb[0].mxu0
        %v1632 = vpop.f32.mrb[0].mxu0
        %v1633 = vadd.f32 %v370, %v1632
        %v1634 = vpop.f32.mrb[0].mxu0
        %1635 = vmatprep.mubr.bf16.mxu0 %v1454
        %1636 = vmatmul.mubr.bf16.gmra.mrb[0].mxu0 %v1453
        %v1637 = vpop.f32.mrb[0].mxu0
        %v1638 = vadd.f32 %v371, %v1637
        %v1639 = vpop.f32.mrb[0].mxu0
        %v1640 = vpop.f32.mrb[0].mxu0
        %v1641 = vadd.f32 %v372, %v1640
        %v1642 = vpop.f32.mrb[0].mxu0
        %1643 = vmatprep.mubr.bf16.mxu0 %v1456
        %1644 = vmatmul.mubr.bf16.gmra.mrb[0].mxu0 %v1455
        %v1645 = vpop.f32.mrb[0].mxu0
        %v1646 = vadd.f32 %v373, %v1645
        %v1647 = vpop.f32.mrb[0].mxu0
        %v1648 = vpop.f32.mrb[0].mxu0
        %v1649 = vadd.f32 %v374, %v1648
        %v1650 = vpop.f32.mrb[0].mxu0
        %1651 = vmatprep.mubr.bf16.mxu0 %v1458
        %1652 = vmatmul.mubr.bf16.gmra.mrb[0].mxu0 %v1457
        %v1653 = vpop.f32.mrb[0].mxu0
        %v1654 = vadd.f32 %v375, %v1653
        %v1655 = vpop.f32.mrb[0].mxu0
        %v1656 = vpop.f32.mrb[0].mxu0
        %v1657 = vadd.f32 %v376, %v1656
        %v1658 = vpop.f32.mrb[0].mxu0
        %1659 = vmatprep.mubr.bf16.mxu0 %v1460
        %1660 = vmatmul.mubr.bf16.gmra.mrb[0].mxu0 %v1459
        %v1661 = vpop.f32.mrb[0].mxu0
        %v1662 = vadd.f32 %v377, %v1661
        %v1663 = vpop.f32.mrb[0].mxu0
        %v1664 = vpop.f32.mrb[0].mxu0
        %v1665 = vadd.f32 %v378, %v1664
        %v1666 = vpop.f32.mrb[0].mxu0
        %1667 = vmatprep.mubr.bf16.mxu0 %v1462
        %1668 = vmatmul.mubr.bf16.gmra.mrb[0].mxu0 %v1461
        %v1669 = vpop.f32.mrb[0].mxu0
        %v1670 = vadd.f32 %v379, %v1669
        %v1671 = vpop.f32.mrb[0].mxu0
        %v1672 = vpop.f32.mrb[0].mxu0
        %v1673 = vadd.f32 %v380, %v1672
        %v1674 = vpop.f32.mrb[0].mxu0
        %1675 = vmatprep.mubr.bf16.mxu0 %v1464
        %1676 = vmatmul.mubr.bf16.gmra.mrb[0].mxu0 %v1463
        %v1677 = vpop.f32.mrb[0].mxu0
        %v1678 = vadd.f32 %v381, %v1677
        %v1679 = vpop.f32.mrb[0].mxu0
        %v1680 = vpop.f32.mrb[0].mxu0
        %v1681 = vadd.f32 %v382, %v1680
        %v1682 = vpop.f32.mrb[0].mxu0
        %1683 = vmatprep.mubr.bf16.mxu0 %v1466
        %1684 = vmatmul.mubr.bf16.gmra.mrb[0].mxu0 %v1465
        %v1685 = vpop.f32.mrb[0].mxu0
        %v1686 = vadd.f32 %v383, %v1685
        %v1687 = vpop.f32.mrb[0].mxu0
        %v1688 = vpop.f32.mrb[0].mxu0
        %v1689 = vadd.f32 %v384, %v1688
        %v1690 = vpop.f32.mrb[0].mxu0
        %1691 = vdwg.mxu0
        %1692 = vst [vmem:[%s365] sm:$0xff] %v1630
        %1693 = vst [vmem:[%s365 + $0x8] sm:$0xff] %v1633
        %1694 = vst [vmem:[%s365 + $0x10] sm:$0xff] %v1638
        %1695 = vst [vmem:[%s365 + $0x18] sm:$0xff] %v1641
        %1696 = vst [vmem:[%s365 + $0x20] sm:$0xff] %v1646
        %1697 = vst [vmem:[%s365 + $0x28] sm:$0xff] %v1649
        %1698 = vst [vmem:[%s365 + $0x30] sm:$0xff] %v1654
        %1699 = vst [vmem:[%s365 + $0x38] sm:$0xff] %v1657
        %1700 = vst [vmem:[%s365 + $0x40] sm:$0xff] %v1662
        %1701 = vst [vmem:[%s365 + $0x48] sm:$0xff] %v1665
        %1702 = vst [vmem:[%s365 + $0x50] sm:$0xff] %v1670
        %1703 = vst [vmem:[%s365 + $0x58] sm:$0xff] %v1673
        %1704 = vst [vmem:[%s365 + $0x60] sm:$0xff] %v1678
        %1705 = vst [vmem:[%s365 + $0x68] sm:$0xff] %v1681
        %1706 = vst [vmem:[%s365 + $0x70] sm:$0xff] %v1686
        %1707 = vst [vmem:[%s365 + $0x78] sm:$0xff] %v1689
        %s1708 = sand.u32 %s192, 1
        %s1709 = scalar_lea.sflag [#allocation5], %s1708
        %s1710 = sand.u32 %s192, 1
        %s1711 = smul.addr %s1710, 128
        %s1712 = scalar_lea.vmem [#allocation9], %s1711
        // Predicated region
        $region64: #{tpu_custom_call.1} parent=43 // pred_check
          %p1713 = pneg %p202
        $region65: #{tpu_custom_call.1} parent=43 // pred_check_branch
          %1715 = sbr.rel (%p1713) target = $region67
        $region66: #{tpu_custom_call.1} parent=43 // pred_region
          %s1716 = smul.u32 16, %s32
          %s1718 = ssub.s32 2048, 2048
          %1719 = vsyncadd %s1709, %s1718
          %s1720 = smul.addr %s31, 32
          %s1721 = sadd.s32 %s1716, %s1720
          %s1722 = smul.addr %s1721, 128
          %s1723 = scalar_lea.hbm %s6, %s1722
          %s1724 = sshll.u32 %s1712, 4
          %s1725 = int_to_ptr.vmem [resolvable:$true] %s1724
          %1730 = dma.vmem_to_hbm [thread:$0]  %s1725, 2048, %s1723, %s1709, 128, 128, 8
        $region67: #{tpu_custom_call.1} parent=43 // pred_fallthru
          _
      $region44: #{tpu_custom_call.1} parent=5 // pred_fallthru
        _
      %p1731 = scmp.le.s32.totalorder 2, %s22
      // Predicated region
      $region68: #{tpu_custom_call.1} parent=5 // pred_check
        %p1732 = pneg %p1731
      $region69: #{tpu_custom_call.1} parent=5 // pred_check_branch
        %1734 = sbr.rel (%p1732) target = $region71
      $region70: #{tpu_custom_call.1} parent=5 // pred_region
        %s1735 = ssub.s32 %s22, 2
        // Predicated region
        $region72: #{tpu_custom_call.1} parent=70 // pred_check
          %p1736 = pneg %p208
        $region73: #{tpu_custom_call.1} parent=70 // pred_check_branch
          %1738 = sbr.rel (%p1736) target = $region75
        $region74: #{tpu_custom_call.1} parent=70 // pred_region
          %s1739 = sand.u32 %s193, 1
          %s1740 = scalar_lea.sflag [#allocation5], %s1739
          %s1741 = sand.u32 %s193, 1
          %s1742 = smul.addr %s1741, 128
          %s1743 = scalar_lea.vmem [#allocation9], %s1742
          %1744 = dma.done %s1740, 2048
        $region75: #{tpu_custom_call.1} parent=70 // pred_fallthru
          _
      $region71: #{tpu_custom_call.1} parent=5 // pred_fallthru
        _
    $region6: #{tpu_custom_call.1} parent=1 // loop_footer
      %s26 = sadd.s32 1, %s22
    $region7: #{tpu_custom_call.1} parent=1 // loop_footer_branch
      %21 = sbr.rel target = $region3
    $region8: #{tpu_custom_call.1} parent=1 // loop_exit
      _
    %1745 = vsyncpa [#allocation4], 1
    %s1746 = scalar_lea.sflag [#allocation4], 1
    %1747 = vsyncpa %s1746, 1
    %1748 = vsyncpa [#allocation7], 1
    %s1749 = scalar_lea.sflag [#allocation7], 1
    %1750 = vsyncpa %s1749, 1
    %1751 = vsyncpa [#allocation5], 1
    %s1752 = scalar_lea.sflag [#allocation5], 1
    %1753 = vsyncpa %s1752, 1

</llo_original>
